<compile_context>
chip_gen: v7x
topology: tpu7x:2x2x1
jax: 0.10.0
libtpu: 0.0.40
codegen_flags: <defaults>
</compile_context>

<pallas_src>
import jax
import jax.numpy as jnp
from jax import lax
from jax.experimental import pallas as pl
from jax.experimental.pallas import tpu as pltpu

_MIB = 1 << 20


# ----------------------------------------------------------------------------
# Helpers
# ----------------------------------------------------------------------------
def _default_conv_dtype():
    """bf16 conv datapath on chips with bf16 VALUs (v6e / v7x); f32 elsewhere."""
    try:
        kind = jax.devices()[0].device_kind.lower()
    except Exception:
        return jnp.float32
    if "v6" in kind or "v7" in kind:
        return jnp.bfloat16
    return jnp.float32


def _round_up(x, m):
    return (x + m - 1) // m * m


def _pick_pass1_tiles(B, C, Tp, conv_itemsize):
    """Pick c_tile (multiple of 8 dividing C, or full C) + a pass-1 VMEM limit."""
    if C % 8 == 0:
        cands = [d for d in range(8, C + 1, 8) if C % d == 0]
    else:
        cands = [C]   # TODO(synk): pad C to a multiple of 8 for large ragged C.

    def working_set(ct):
        # 2x double-buffered f32 x block + ~5 live (c_tile, Tp) conv-dtype values.
        return ct * Tp * (2 * 4 + 5 * conv_itemsize)

    budget = 36 * _MIB
    fitting = [c for c in cands if c <= 128 and working_set(c) <= budget]
    c_tile = max(fitting) if fitting else min(cands)
    # TODO(synk): if even the smallest c_tile blows the budget (very long T),
    # add a T reduction axis with a (k-1) halo instead of shrinking c_tile.

    # Expose >= 2 grid steps for megacore / v7x dual-TC when the batch is 1.
    if B == 1 and C // c_tile < 2:
        smaller = [c for c in cands if c < c_tile]
        if smaller:
            c_tile = max(smaller)

    vmem_limit = max(32 * _MIB,
                     min(int(working_set(c_tile) * 1.25) + 4 * _MIB, 64 * _MIB))
    return c_tile, vmem_limit


def _pick_pass2_tiles(C, T, itemsize):
    """Tiles for the streaming rescale pass; target ~4 MiB blocks."""
    if C % 8 == 0:
        c_cands = [d for d in range(8, min(C, 256) + 1, 8) if C % d == 0]
        c_tile = max(c_cands) if c_cands else C
    else:
        c_tile = C
    if T % 128 == 0:
        target = max(128, (4 * _MIB) // (itemsize * c_tile))
        t_cands = [t for t in range(128, T + 1, 128) if T % t == 0 and t <= target]
        t_tile = max(t_cands) if t_cands else T
    else:
        # TODO(synk): pad/mask a ragged time tail instead of one full-T block.
        t_tile = T
    block_bytes = c_tile * t_tile * itemsize
    vmem_limit = max(32 * _MIB, min(4 * block_bytes + 4 * _MIB, 64 * _MIB))
    return c_tile, t_tile, vmem_limit


# ----------------------------------------------------------------------------
# Pass 1: three depthwise-conv branches + global average pool -> (B, C, 3)
# ----------------------------------------------------------------------------
def _make_features_kernel(ks, T_real, Tp, conv_dtype):
    def kernel(x_ref,                                   # (1, c_tile, Tp) f32
               ws1, bs1, ws2, bs2,                      # small branch (k=ks[0])
               wm1, bm1, wm2, bm2,                      # middle branch (k=ks[1])
               wl1, bl1, wl2, bl2,                      # large branch (k=ks[2])
               feat_ref):                               # (1, c_tile, 3) f32
        c_tile = x_ref.shape[1]
        xv = x_ref[0].astype(conv_dtype)                # cast once in-kernel
        t_idx = lax.broadcasted_iota(jnp.int32, (c_tile, Tp), 1)

        def dw_conv_relu(v, w_ref, b_ref):
            # Depthwise "valid" conv + bias + ReLU computed over the full padded
            # width.  Tap j is a static lane rotation (XLU) of the input value;
            # positions >= valid length hold garbage and are masked at pooling.
            k = w_ref.shape[0]
            acc = b_ref[...] + v * w_ref[0]             # bias-seeded accumulator
            for j in range(1, k):                       # k is static (3/5/10)
                tap = pltpu.roll(v, shift=Tp - j, axis=1)   # tap[i] == v[i + j]
                acc = acc + tap * w_ref[j]
            return jnp.maximum(acc, 0.0)

        def branch(w1, b1, w2, b2, k):
            L2 = T_real - 2 * (k - 1)                   # valid length after 2 convs
            y1 = dw_conv_relu(xv, w1, b1)
            y2 = dw_conv_relu(y1, w2, b2)
            y2 = jnp.where(t_idx < L2, y2.astype(jnp.float32), 0.0)
            # AdaptiveAvgPool1d(1) over the valid region (f32 accumulation).
            return jnp.sum(y2, axis=1, keepdims=True) * (1.0 / float(L2))

        p_small = branch(ws1, bs1, ws2, bs2, ks[0])
        p_mid = branch(wm1, bm1, wm2, bm2, ks[1])
        p_large = branch(wl1, bl1, wl2, bl2, ks[2])

        # torch.cat([small, middle, large], dim=2) order.  (Last dim of 3 is a
        # masked partial store, but the feature output is ~0.01% of the input
        # traffic, so a lane-dense (B, 3, C) layout is not worth the transpose.)
        feat_ref[0] = jnp.concatenate([p_small, p_mid, p_large], axis=1)

    return kernel


# ----------------------------------------------------------------------------
# Pass 2: channel-wise rescale  out[b, c, t] = x[b, c, t] * s[b, c]
# ----------------------------------------------------------------------------
def _rescale_kernel(x_ref, s_ref, o_ref):
    # x_ref: (1, c_tile, t_tile)   s_ref: (1, c_tile, 1)
    o_ref[...] = (x_ref[...] * s_ref[...]).astype(o_ref.dtype)


# ----------------------------------------------------------------------------
# Wrapper
# ----------------------------------------------------------------------------
def channel_deep_time_sense_se(x, params, kersize=(3, 5, 10), conv_dtype=None):
    """x: (B, C, T) float32.  params from init_params().  Returns (out, s)."""
    B, C, T = x.shape
    ks = list(kersize)
    kmax = max(ks)
    if T < 2 * (kmax - 1) + 1:
        raise ValueError(
            f"T={T} too short for kernel size {kmax}; need T >= {2 * (kmax - 1) + 1}")

    if conv_dtype is None:
        conv_dtype = _default_conv_dtype()
    conv_dtype = jnp.dtype(conv_dtype)
    conv_itemsize = conv_dtype.itemsize

    # Pad T to a lane multiple so tap rotations / blocks are 128-aligned; masks
    # inside the kernel use the real length.
    Tp = _round_up(T, 128)
    x_p1 = x if Tp == T else jnp.pad(x, ((0, 0), (0, 0), (0, Tp - T)))

    c_tile, vmem1 = _pick_pass1_tiles(B, C, Tp, conv_itemsize)
    n_ct = C // c_tile

    # Conv weights/biases are tiny -> cast once on the host to the conv dtype.
    conv_args = tuple(params[n].astype(conv_dtype) for n in
                      ("ws1", "bs1", "ws2", "bs2",
                       "wm1", "bm1", "wm2", "bm2",
                       "wl1", "bl1", "wl2", "bl2"))

    def w_spec(k):
        return pl.BlockSpec((k, c_tile, 1), lambda ci, b: (0, ci, 0))

    b_spec = pl.BlockSpec((c_tile, 1), lambda ci, b: (ci, 0))
    conv_specs = []
    for k in ks:
        conv_specs += [w_spec(k), b_spec, w_spec(k), b_spec]

    feat_flops = int(B * C * sum(4 * k * Tp + 2 * Tp for k in ks))
    feat_bytes = int(4 * B * C * Tp + 4 * B * C * 3
                     + sum(int(a.size) for a in conv_args) * conv_itemsize)

    features_kernel = _make_features_kernel(ks, T, Tp, conv_dtype)

    feat = pl.pallas_call(
        features_kernel,
        out_shape=jax.ShapeDtypeStruct((B, C, 3), jnp.float32),
        grid_spec=pltpu.PrefetchScalarGridSpec(
            num_scalar_prefetch=0,
            # Grid (ci, b): weight/bias block indices depend only on ci, so
            # their DMAs are not re-issued while b (the inner axis) varies.
            grid=(n_ct, B),
            in_specs=[pl.BlockSpec((1, c_tile, Tp), lambda ci, b: (b, ci, 0))]
                     + conv_specs,
            out_specs=pl.BlockSpec((1, c_tile, 3), lambda ci, b: (b, ci, 0)),
        ),
        compiler_params=pltpu.CompilerParams(
            dimension_semantics=("parallel", "parallel"),
            vmem_limit_bytes=vmem1),
        cost_estimate=pl.CostEstimate(flops=feat_flops, transcendentals=0,
                                      bytes_accessed=feat_bytes),
    )(x_p1, *conv_args)

    # ---------------- tiny SE MLP in plain JAX (per perf review) ------------
    squeeze = jnp.einsum("bci,i->bc", feat, params["wcat"][0]) + params["bcat"][0, 0]
    h = jax.nn.relu(squeeze @ params["wfc1_t"] + params["bfc1"])        # (B, 16)
    s = jax.nn.sigmoid(h @ params["wfc2_t"] + params["bfc2"])           # (B, C)

    # ---------------- pass 2: tiled channel-wise rescale ---------------------
    c_tile2, t_tile, vmem2 = _pick_pass2_tiles(C, T, x.dtype.itemsize)
    n_ct2 = C // c_tile2
    n_tt = T // t_tile
    s3 = s.reshape(B, C, 1).astype(jnp.float32)

    # TODO(synk): add input_output_aliases={0: 0} once callers can donate x.
    out = pl.pallas_call(
        _rescale_kernel,
        out_shape=jax.ShapeDtypeStruct((B, C, T), x.dtype),
        grid_spec=pltpu.PrefetchScalarGridSpec(
            num_scalar_prefetch=0,
            grid=(B, n_ct2, n_tt),
            in_specs=[
                pl.BlockSpec((1, c_tile2, t_tile), lambda b, ci, ti: (b, ci, ti)),
                pl.BlockSpec((1, c_tile2, 1), lambda b, ci, ti: (b, ci, 0)),
            ],
            out_specs=pl.BlockSpec((1, c_tile2, t_tile),
                                   lambda b, ci, ti: (b, ci, ti))),
        compiler_params=pltpu.CompilerParams(
            dimension_semantics=("parallel", "parallel", "parallel"),
            vmem_limit_bytes=vmem2),
        cost_estimate=pl.CostEstimate(
            flops=int(B * C * T), transcendentals=0,
            bytes_accessed=int(x.dtype.itemsize * 2 * B * C * T + 4 * B * C)),
    )(x, s3)

    return out, s


# ----------------------------------------------------------------------------
# Parameter init (PyTorch-default-style uniform), stored in the kernel layout.
# ----------------------------------------------------------------------------
def init_params(key, num_channels, kersize=(3, 5, 10), reduced=16):
    ks = list(kersize)
    keys = jax.random.split(key, 20)
    ki = iter(keys)

    def unif(k, shape, fan_in):
        bound = 1.0 / (float(fan_in) ** 0.5)
        return jax.random.uniform(k, shape, jnp.float32, -bound, bound)

    p = {}
    names = [("ws1", "bs1", "ws2", "bs2"),
             ("wm1", "bm1", "wm2", "bm2"),
             ("wl1", "bl1", "wl2", "bl2")]
    for (w1n, b1n, w2n, b2n), k in zip(names, ks):
        # depthwise conv: torch weight (C, 1, k) -> stored (k, C, 1); fan_in = k
        p[w1n] = unif(next(ki), (k, num_channels, 1), k)
        p[b1n] = unif(next(ki), (num_channels, 1), k)
        p[w2n] = unif(next(ki), (k, num_channels, 1), k)
        p[b2n] = unif(next(ki), (num_channels, 1), k)
    # Linear(3, 1)
    p["wcat"] = unif(next(ki), (1, 3), 3)
    p["bcat"] = unif(next(ki), (1, 1), 3)
    # Linear(C, 16) and Linear(16, C), stored pre-transposed as (in, out)
    p["wfc1_t"] = unif(next(ki), (num_channels, reduced), num_channels)
    p["bfc1"] = unif(next(ki), (reduced,), num_channels)
    p["wfc2_t"] = unif(next(ki), (reduced, num_channels), reduced)
    p["bfc2"] = unif(next(ki), (num_channels,), reduced)
    return p


# ----------------------------------------------------------------------------
# Pure-JAX reference mirroring the PyTorch module semantics.
# ----------------------------------------------------------------------------
def _reference(x, params, kersize=(3, 5, 10)):
    def dw_conv_relu(inp, w, b):
        k = w.shape[0]
        Lout = inp.shape[2] - k + 1
        acc = sum(inp[:, :, j:j + Lout] * w[j, :, 0][None, :, None] for j in range(k))
        return jax.nn.relu(acc + b[None, :, :])

    def branch(w1, b1, w2, b2):
        y = dw_conv_relu(x, w1, b1)
        y = dw_conv_relu(y, w2, b2)
        return jnp.mean(y, axis=2)                               # (B, C)

    f_s = branch(params["ws1"], params["bs1"], params["ws2"], params["bs2"])
    f_m = branch(params["wm1"], params["bm1"], params["wm2"], params["bm2"])
    f_l = branch(params["wl1"], params["bl1"], params["wl2"], params["bl2"])
    feat = jnp.stack([f_s, f_m, f_l], axis=2)                    # (B, C, 3)
    squeeze = jnp.einsum("bci,i->bc", feat, params["wcat"][0]) + params["bcat"][0, 0]
    h = jax.nn.relu(squeeze @ params["wfc1_t"] + params["bfc1"])
    s = jax.nn.sigmoid(h @ params["wfc2_t"] + params["bfc2"])
    return x * s[:, :, None], s


if __name__ == "__main__":
    key = jax.random.PRNGKey(0)
    kx, kp, kx2, kp2 = jax.random.split(key, 4)

    # Main config: lane-aligned T, C sized so a bf16 block fills a packed vreg.
    B, C, T = 2, 16, 128
    x = jax.random.normal(kx, (B, C, T), jnp.float32)
    params = init_params(kp, C)
    ref_out, ref_s = _reference(x, params)

    # 1) f32 parity path (bit-level-tight tolerance).
    out32, s32 = channel_deep_time_sense_se(x, params, conv_dtype=jnp.float32)
    out32 = jax.block_until_ready(out32)
    s32 = jax.block_until_ready(s32)
    assert out32.shape == (B, C, T) and s32.shape == (B, C)
    assert jnp.allclose(out32, ref_out, atol=1e-5, rtol=1e-5)
    assert jnp.allclose(s32, ref_s, atol=1e-5, rtol=1e-5)

    # 2) default datapath (bf16 conv path on v6e/v7x, f32 elsewhere).
    out_d, s_d = channel_deep_time_sense_se(x, params)
    out_d = jax.block_until_ready(out_d)
    s_d = jax.block_until_ready(s_d)
    assert jnp.allclose(out_d, ref_out, atol=1e-1, rtol=1e-1)
    assert jnp.allclose(s_d, ref_s, atol=5e-2, rtol=5e-2)

    # 3) ragged T (exercises the lane-padding path) and tiny, non-8-divisible C.
    B2, C2, T2 = 1, 4, 96
    x2 = jax.random.normal(kx2, (B2, C2, T2), jnp.float32)
    params2 = init_params(kp2, C2)
    out2, s2 = channel_deep_time_sense_se(x2, params2, conv_dtype=jnp.float32)
    out2 = jax.block_until_ready(out2)
    s2 = jax.block_until_ready(s2)
    ref_out2, ref_s2 = _reference(x2, params2)
    assert jnp.allclose(out2, ref_out2, atol=1e-5, rtol=1e-5)
    assert jnp.allclose(s2, ref_s2, atol=1e-5, rtol=1e-5)

    print("KERNEL_OK")
</pallas_src>

<mosaic_0001>
module attributes {stable_mosaic.version = 11 : i64} {
  func.func @kernel(%arg0: i32, %arg1: i32, %arg2: memref<1x16x128xf32, #tpu.memory_space<vmem>>, %arg3: memref<3x16x1xf32, #tpu.memory_space<vmem>>, %arg4: memref<16x1xf32, #tpu.memory_space<vmem>>, %arg5: memref<3x16x1xf32, #tpu.memory_space<vmem>>, %arg6: memref<16x1xf32, #tpu.memory_space<vmem>>, %arg7: memref<5x16x1xf32, #tpu.memory_space<vmem>>, %arg8: memref<16x1xf32, #tpu.memory_space<vmem>>, %arg9: memref<5x16x1xf32, #tpu.memory_space<vmem>>, %arg10: memref<16x1xf32, #tpu.memory_space<vmem>>, %arg11: memref<10x16x1xf32, #tpu.memory_space<vmem>>, %arg12: memref<16x1xf32, #tpu.memory_space<vmem>>, %arg13: memref<10x16x1xf32, #tpu.memory_space<vmem>>, %arg14: memref<16x1xf32, #tpu.memory_space<vmem>>, %arg15: memref<1x16x3xf32, #tpu.memory_space<vmem>>) attributes {dimension_semantics = [#tpu.dimension_semantics<parallel>, #tpu.dimension_semantics<parallel>], iteration_bounds = array<i64: 1, 2>, scalar_prefetch = 0 : i64, scratch_operands = 0 : i64, tpu.core_type = #tpu.core_type<tc>, window_params = [{transform_indices = @transform_0, window_bounds = array<i64: 1, 16, 128>}, {transform_indices = @transform_1, window_bounds = array<i64: 3, 16, 1>}, {transform_indices = @transform_2, window_bounds = array<i64: 16, 1>}, {transform_indices = @transform_3, window_bounds = array<i64: 3, 16, 1>}, {transform_indices = @transform_4, window_bounds = array<i64: 16, 1>}, {transform_indices = @transform_5, window_bounds = array<i64: 5, 16, 1>}, {transform_indices = @transform_6, window_bounds = array<i64: 16, 1>}, {transform_indices = @transform_7, window_bounds = array<i64: 5, 16, 1>}, {transform_indices = @transform_8, window_bounds = array<i64: 16, 1>}, {transform_indices = @transform_9, window_bounds = array<i64: 10, 16, 1>}, {transform_indices = @transform_10, window_bounds = array<i64: 16, 1>}, {transform_indices = @transform_11, window_bounds = array<i64: 10, 16, 1>}, {transform_indices = @transform_12, window_bounds = array<i64: 16, 1>}, {transform_indices = @transform_13, window_bounds = array<i64: 1, 16, 3>}]} {
    %c0 = arith.constant 0 : index
    %c0_0 = arith.constant 0 : index
    %c0_1 = arith.constant 0 : index
    %0 = vector.load %arg2[%c0, %c0_0, %c0_1] : memref<1x16x128xf32, #tpu.memory_space<vmem>>, vector<1x16x128xf32>
    %1 = vector.shape_cast %0 : vector<1x16x128xf32> to vector<16x128xf32>
    %2 = tpu.iota {dimensions = array<i32: 1>} : vector<16x128xi32>
    %c0_2 = arith.constant 0 : index
    %c0_3 = arith.constant 0 : index
    %3 = vector.load %arg4[%c0_2, %c0_3] : memref<16x1xf32, #tpu.memory_space<vmem>>, vector<16x1xf32>
    %c0_4 = arith.constant 0 : index
    %c0_5 = arith.constant 0 : index
    %c0_6 = arith.constant 0 : index
    %4 = vector.load %arg3[%c0_4, %c0_5, %c0_6] : memref<3x16x1xf32, #tpu.memory_space<vmem>>, vector<1x16x1xf32>
    %5 = vector.shape_cast %4 : vector<1x16x1xf32> to vector<16x1xf32>
    %6 = vector.broadcast %5 : vector<16x1xf32> to vector<16x128xf32>
    %7 = arith.mulf %1, %6 : vector<16x128xf32>
    %8 = vector.broadcast %3 : vector<16x1xf32> to vector<16x128xf32>
    %9 = arith.addf %8, %7 : vector<16x128xf32>
    %c127_i32 = arith.constant 127 : i32
    %10 = tpu.dynamic_rotate %1 by %c127_i32 dim 1 : vector<16x128xf32>, i32 -> vector<16x128xf32>
    %c1 = arith.constant 1 : index
    %c0_7 = arith.constant 0 : index
    %c0_8 = arith.constant 0 : index
    %11 = vector.load %arg3[%c1, %c0_7, %c0_8] : memref<3x16x1xf32, #tpu.memory_space<vmem>>, vector<1x16x1xf32>
    %12 = vector.shape_cast %11 : vector<1x16x1xf32> to vector<16x1xf32>
    %13 = vector.broadcast %12 : vector<16x1xf32> to vector<16x128xf32>
    %14 = arith.mulf %10, %13 : vector<16x128xf32>
    %15 = arith.addf %9, %14 : vector<16x128xf32>
    %c126_i32 = arith.constant 126 : i32
    %16 = tpu.dynamic_rotate %1 by %c126_i32 dim 1 : vector<16x128xf32>, i32 -> vector<16x128xf32>
    %c2 = arith.constant 2 : index
    %c0_9 = arith.constant 0 : index
    %c0_10 = arith.constant 0 : index
    %17 = vector.load %arg3[%c2, %c0_9, %c0_10] : memref<3x16x1xf32, #tpu.memory_space<vmem>>, vector<1x16x1xf32>
    %18 = vector.shape_cast %17 : vector<1x16x1xf32> to vector<16x1xf32>
    %19 = vector.broadcast %18 : vector<16x1xf32> to vector<16x128xf32>
    %20 = arith.mulf %16, %19 : vector<16x128xf32>
    %21 = arith.addf %15, %20 : vector<16x128xf32>
    %cst = arith.constant 0.000000e+00 : f32
    %22 = vector.broadcast %cst : f32 to vector<16x128xf32>
    %23 = arith.maximumf %21, %22 : vector<16x128xf32>
    %c0_11 = arith.constant 0 : index
    %c0_12 = arith.constant 0 : index
    %24 = vector.load %arg6[%c0_11, %c0_12] : memref<16x1xf32, #tpu.memory_space<vmem>>, vector<16x1xf32>
    %c0_13 = arith.constant 0 : index
    %c0_14 = arith.constant 0 : index
    %c0_15 = arith.constant 0 : index
    %25 = vector.load %arg5[%c0_13, %c0_14, %c0_15] : memref<3x16x1xf32, #tpu.memory_space<vmem>>, vector<1x16x1xf32>
    %26 = vector.shape_cast %25 : vector<1x16x1xf32> to vector<16x1xf32>
    %27 = vector.broadcast %26 : vector<16x1xf32> to vector<16x128xf32>
    %28 = arith.mulf %23, %27 : vector<16x128xf32>
    %29 = vector.broadcast %24 : vector<16x1xf32> to vector<16x128xf32>
    %30 = arith.addf %29, %28 : vector<16x128xf32>
    %c127_i32_16 = arith.constant 127 : i32
    %31 = tpu.dynamic_rotate %23 by %c127_i32_16 dim 1 : vector<16x128xf32>, i32 -> vector<16x128xf32>
    %c1_17 = arith.constant 1 : index
    %c0_18 = arith.constant 0 : index
    %c0_19 = arith.constant 0 : index
    %32 = vector.load %arg5[%c1_17, %c0_18, %c0_19] : memref<3x16x1xf32, #tpu.memory_space<vmem>>, vector<1x16x1xf32>
    %33 = vector.shape_cast %32 : vector<1x16x1xf32> to vector<16x1xf32>
    %34 = vector.broadcast %33 : vector<16x1xf32> to vector<16x128xf32>
    %35 = arith.mulf %31, %34 : vector<16x128xf32>
    %36 = arith.addf %30, %35 : vector<16x128xf32>
    %c126_i32_20 = arith.constant 126 : i32
    %37 = tpu.dynamic_rotate %23 by %c126_i32_20 dim 1 : vector<16x128xf32>, i32 -> vector<16x128xf32>
    %c2_21 = arith.constant 2 : index
    %c0_22 = arith.constant 0 : index
    %c0_23 = arith.constant 0 : index
    %38 = vector.load %arg5[%c2_21, %c0_22, %c0_23] : memref<3x16x1xf32, #tpu.memory_space<vmem>>, vector<1x16x1xf32>
    %39 = vector.shape_cast %38 : vector<1x16x1xf32> to vector<16x1xf32>
    %40 = vector.broadcast %39 : vector<16x1xf32> to vector<16x128xf32>
    %41 = arith.mulf %37, %40 : vector<16x128xf32>
    %42 = arith.addf %36, %41 : vector<16x128xf32>
    %cst_24 = arith.constant 0.000000e+00 : f32
    %43 = vector.broadcast %cst_24 : f32 to vector<16x128xf32>
    %44 = arith.maximumf %42, %43 : vector<16x128xf32>
    %c124_i32 = arith.constant 124 : i32
    %45 = vector.broadcast %c124_i32 : i32 to vector<16x128xi32>
    %46 = arith.cmpi slt, %2, %45 : vector<16x128xi32>
    %cst_25 = arith.constant 0.000000e+00 : f32
    %47 = vector.broadcast %cst_25 : f32 to vector<16x128xf32>
    %48 = arith.select %46, %44, %47 : vector<16x128xi1>, vector<16x128xf32>
    %cst_26 = arith.constant dense<0.000000e+00> : vector<16xf32>
    %49 = vector.multi_reduction <add>, %48, %cst_26 [1] : vector<16x128xf32> to vector<16xf32>
    %50 = vector.shape_cast %49 : vector<16xf32> to vector<16x1xf32>
    %cst_27 = arith.constant 0.00806451589 : f32
    %51 = vector.broadcast %cst_27 : f32 to vector<16x1xf32>
    %52 = arith.mulf %50, %51 : vector<16x1xf32>
    %c0_28 = arith.constant 0 : index
    %c0_29 = arith.constant 0 : index
    %53 = vector.load %arg8[%c0_28, %c0_29] : memref<16x1xf32, #tpu.memory_space<vmem>>, vector<16x1xf32>
    %c0_30 = arith.constant 0 : index
    %c0_31 = arith.constant 0 : index
    %c0_32 = arith.constant 0 : index
    %54 = vector.load %arg7[%c0_30, %c0_31, %c0_32] : memref<5x16x1xf32, #tpu.memory_space<vmem>>, vector<1x16x1xf32>
    %55 = vector.shape_cast %54 : vector<1x16x1xf32> to vector<16x1xf32>
    %56 = vector.broadcast %55 : vector<16x1xf32> to vector<16x128xf32>
    %57 = arith.mulf %1, %56 : vector<16x128xf32>
    %58 = vector.broadcast %53 : vector<16x1xf32> to vector<16x128xf32>
    %59 = arith.addf %58, %57 : vector<16x128xf32>
    %c127_i32_33 = arith.constant 127 : i32
    %60 = tpu.dynamic_rotate %1 by %c127_i32_33 dim 1 : vector<16x128xf32>, i32 -> vector<16x128xf32>
    %c1_34 = arith.constant 1 : index
    %c0_35 = arith.constant 0 : index
    %c0_36 = arith.constant 0 : index
    %61 = vector.load %arg7[%c1_34, %c0_35, %c0_36] : memref<5x16x1xf32, #tpu.memory_space<vmem>>, vector<1x16x1xf32>
    %62 = vector.shape_cast %61 : vector<1x16x1xf32> to vector<16x1xf32>
    %63 = vector.broadcast %62 : vector<16x1xf32> to vector<16x128xf32>
    %64 = arith.mulf %60, %63 : vector<16x128xf32>
    %65 = arith.addf %59, %64 : vector<16x128xf32>
    %c126_i32_37 = arith.constant 126 : i32
    %66 = tpu.dynamic_rotate %1 by %c126_i32_37 dim 1 : vector<16x128xf32>, i32 -> vector<16x128xf32>
    %c2_38 = arith.constant 2 : index
    %c0_39 = arith.constant 0 : index
    %c0_40 = arith.constant 0 : index
    %67 = vector.load %arg7[%c2_38, %c0_39, %c0_40] : memref<5x16x1xf32, #tpu.memory_space<vmem>>, vector<1x16x1xf32>
    %68 = vector.shape_cast %67 : vector<1x16x1xf32> to vector<16x1xf32>
    %69 = vector.broadcast %68 : vector<16x1xf32> to vector<16x128xf32>
    %70 = arith.mulf %66, %69 : vector<16x128xf32>
    %71 = arith.addf %65, %70 : vector<16x128xf32>
    %c125_i32 = arith.constant 125 : i32
    %72 = tpu.dynamic_rotate %1 by %c125_i32 dim 1 : vector<16x128xf32>, i32 -> vector<16x128xf32>
    %c3 = arith.constant 3 : index
    %c0_41 = arith.constant 0 : index
    %c0_42 = arith.constant 0 : index
    %73 = vector.load %arg7[%c3, %c0_41, %c0_42] : memref<5x16x1xf32, #tpu.memory_space<vmem>>, vector<1x16x1xf32>
    %74 = vector.shape_cast %73 : vector<1x16x1xf32> to vector<16x1xf32>
    %75 = vector.broadcast %74 : vector<16x1xf32> to vector<16x128xf32>
    %76 = arith.mulf %72, %75 : vector<16x128xf32>
    %77 = arith.addf %71, %76 : vector<16x128xf32>
    %c124_i32_43 = arith.constant 124 : i32
    %78 = tpu.dynamic_rotate %1 by %c124_i32_43 dim 1 : vector<16x128xf32>, i32 -> vector<16x128xf32>
    %c4 = arith.constant 4 : index
    %c0_44 = arith.constant 0 : index
    %c0_45 = arith.constant 0 : index
    %79 = vector.load %arg7[%c4, %c0_44, %c0_45] : memref<5x16x1xf32, #tpu.memory_space<vmem>>, vector<1x16x1xf32>
    %80 = vector.shape_cast %79 : vector<1x16x1xf32> to vector<16x1xf32>
    %81 = vector.broadcast %80 : vector<16x1xf32> to vector<16x128xf32>
    %82 = arith.mulf %78, %81 : vector<16x128xf32>
    %83 = arith.addf %77, %82 : vector<16x128xf32>
    %cst_46 = arith.constant 0.000000e+00 : f32
    %84 = vector.broadcast %cst_46 : f32 to vector<16x128xf32>
    %85 = arith.maximumf %83, %84 : vector<16x128xf32>
    %c0_47 = arith.constant 0 : index
    %c0_48 = arith.constant 0 : index
    %86 = vector.load %arg10[%c0_47, %c0_48] : memref<16x1xf32, #tpu.memory_space<vmem>>, vector<16x1xf32>
    %c0_49 = arith.constant 0 : index
    %c0_50 = arith.constant 0 : index
    %c0_51 = arith.constant 0 : index
    %87 = vector.load %arg9[%c0_49, %c0_50, %c0_51] : memref<5x16x1xf32, #tpu.memory_space<vmem>>, vector<1x16x1xf32>
    %88 = vector.shape_cast %87 : vector<1x16x1xf32> to vector<16x1xf32>
    %89 = vector.broadcast %88 : vector<16x1xf32> to vector<16x128xf32>
    %90 = arith.mulf %85, %89 : vector<16x128xf32>
    %91 = vector.broadcast %86 : vector<16x1xf32> to vector<16x128xf32>
    %92 = arith.addf %91, %90 : vector<16x128xf32>
    %c127_i32_52 = arith.constant 127 : i32
    %93 = tpu.dynamic_rotate %85 by %c127_i32_52 dim 1 : vector<16x128xf32>, i32 -> vector<16x128xf32>
    %c1_53 = arith.constant 1 : index
    %c0_54 = arith.constant 0 : index
    %c0_55 = arith.constant 0 : index
    %94 = vector.load %arg9[%c1_53, %c0_54, %c0_55] : memref<5x16x1xf32, #tpu.memory_space<vmem>>, vector<1x16x1xf32>
    %95 = vector.shape_cast %94 : vector<1x16x1xf32> to vector<16x1xf32>
    %96 = vector.broadcast %95 : vector<16x1xf32> to vector<16x128xf32>
    %97 = arith.mulf %93, %96 : vector<16x128xf32>
    %98 = arith.addf %92, %97 : vector<16x128xf32>
    %c126_i32_56 = arith.constant 126 : i32
    %99 = tpu.dynamic_rotate %85 by %c126_i32_56 dim 1 : vector<16x128xf32>, i32 -> vector<16x128xf32>
    %c2_57 = arith.constant 2 : index
    %c0_58 = arith.constant 0 : index
    %c0_59 = arith.constant 0 : index
    %100 = vector.load %arg9[%c2_57, %c0_58, %c0_59] : memref<5x16x1xf32, #tpu.memory_space<vmem>>, vector<1x16x1xf32>
    %101 = vector.shape_cast %100 : vector<1x16x1xf32> to vector<16x1xf32>
    %102 = vector.broadcast %101 : vector<16x1xf32> to vector<16x128xf32>
    %103 = arith.mulf %99, %102 : vector<16x128xf32>
    %104 = arith.addf %98, %103 : vector<16x128xf32>
    %c125_i32_60 = arith.constant 125 : i32
    %105 = tpu.dynamic_rotate %85 by %c125_i32_60 dim 1 : vector<16x128xf32>, i32 -> vector<16x128xf32>
    %c3_61 = arith.constant 3 : index
    %c0_62 = arith.constant 0 : index
    %c0_63 = arith.constant 0 : index
    %106 = vector.load %arg9[%c3_61, %c0_62, %c0_63] : memref<5x16x1xf32, #tpu.memory_space<vmem>>, vector<1x16x1xf32>
    %107 = vector.shape_cast %106 : vector<1x16x1xf32> to vector<16x1xf32>
    %108 = vector.broadcast %107 : vector<16x1xf32> to vector<16x128xf32>
    %109 = arith.mulf %105, %108 : vector<16x128xf32>
    %110 = arith.addf %104, %109 : vector<16x128xf32>
    %c124_i32_64 = arith.constant 124 : i32
    %111 = tpu.dynamic_rotate %85 by %c124_i32_64 dim 1 : vector<16x128xf32>, i32 -> vector<16x128xf32>
    %c4_65 = arith.constant 4 : index
    %c0_66 = arith.constant 0 : index
    %c0_67 = arith.constant 0 : index
    %112 = vector.load %arg9[%c4_65, %c0_66, %c0_67] : memref<5x16x1xf32, #tpu.memory_space<vmem>>, vector<1x16x1xf32>
    %113 = vector.shape_cast %112 : vector<1x16x1xf32> to vector<16x1xf32>
    %114 = vector.broadcast %113 : vector<16x1xf32> to vector<16x128xf32>
    %115 = arith.mulf %111, %114 : vector<16x128xf32>
    %116 = arith.addf %110, %115 : vector<16x128xf32>
    %cst_68 = arith.constant 0.000000e+00 : f32
    %117 = vector.broadcast %cst_68 : f32 to vector<16x128xf32>
    %118 = arith.maximumf %116, %117 : vector<16x128xf32>
    %c120_i32 = arith.constant 120 : i32
    %119 = vector.broadcast %c120_i32 : i32 to vector<16x128xi32>
    %120 = arith.cmpi slt, %2, %119 : vector<16x128xi32>
    %cst_69 = arith.constant 0.000000e+00 : f32
    %121 = vector.broadcast %cst_69 : f32 to vector<16x128xf32>
    %122 = arith.select %120, %118, %121 : vector<16x128xi1>, vector<16x128xf32>
    %cst_70 = arith.constant dense<0.000000e+00> : vector<16xf32>
    %123 = vector.multi_reduction <add>, %122, %cst_70 [1] : vector<16x128xf32> to vector<16xf32>
    %124 = vector.shape_cast %123 : vector<16xf32> to vector<16x1xf32>
    %cst_71 = arith.constant 0.00833333377 : f32
    %125 = vector.broadcast %cst_71 : f32 to vector<16x1xf32>
    %126 = arith.mulf %124, %125 : vector<16x1xf32>
    %c0_72 = arith.constant 0 : index
    %c0_73 = arith.constant 0 : index
    %127 = vector.load %arg12[%c0_72, %c0_73] : memref<16x1xf32, #tpu.memory_space<vmem>>, vector<16x1xf32>
    %c0_74 = arith.constant 0 : index
    %c0_75 = arith.constant 0 : index
    %c0_76 = arith.constant 0 : index
    %128 = vector.load %arg11[%c0_74, %c0_75, %c0_76] : memref<10x16x1xf32, #tpu.memory_space<vmem>>, vector<1x16x1xf32>
    %129 = vector.shape_cast %128 : vector<1x16x1xf32> to vector<16x1xf32>
    %130 = vector.broadcast %129 : vector<16x1xf32> to vector<16x128xf32>
    %131 = arith.mulf %1, %130 : vector<16x128xf32>
    %132 = vector.broadcast %127 : vector<16x1xf32> to vector<16x128xf32>
    %133 = arith.addf %132, %131 : vector<16x128xf32>
    %c127_i32_77 = arith.constant 127 : i32
    %134 = tpu.dynamic_rotate %1 by %c127_i32_77 dim 1 : vector<16x128xf32>, i32 -> vector<16x128xf32>
    %c1_78 = arith.constant 1 : index
    %c0_79 = arith.constant 0 : index
    %c0_80 = arith.constant 0 : index
    %135 = vector.load %arg11[%c1_78, %c0_79, %c0_80] : memref<10x16x1xf32, #tpu.memory_space<vmem>>, vector<1x16x1xf32>
    %136 = vector.shape_cast %135 : vector<1x16x1xf32> to vector<16x1xf32>
    %137 = vector.broadcast %136 : vector<16x1xf32> to vector<16x128xf32>
    %138 = arith.mulf %134, %137 : vector<16x128xf32>
    %139 = arith.addf %133, %138 : vector<16x128xf32>
    %c126_i32_81 = arith.constant 126 : i32
    %140 = tpu.dynamic_rotate %1 by %c126_i32_81 dim 1 : vector<16x128xf32>, i32 -> vector<16x128xf32>
    %c2_82 = arith.constant 2 : index
    %c0_83 = arith.constant 0 : index
    %c0_84 = arith.constant 0 : index
    %141 = vector.load %arg11[%c2_82, %c0_83, %c0_84] : memref<10x16x1xf32, #tpu.memory_space<vmem>>, vector<1x16x1xf32>
    %142 = vector.shape_cast %141 : vector<1x16x1xf32> to vector<16x1xf32>
    %143 = vector.broadcast %142 : vector<16x1xf32> to vector<16x128xf32>
    %144 = arith.mulf %140, %143 : vector<16x128xf32>
    %145 = arith.addf %139, %144 : vector<16x128xf32>
    %c125_i32_85 = arith.constant 125 : i32
    %146 = tpu.dynamic_rotate %1 by %c125_i32_85 dim 1 : vector<16x128xf32>, i32 -> vector<16x128xf32>
    %c3_86 = arith.constant 3 : index
    %c0_87 = arith.constant 0 : index
    %c0_88 = arith.constant 0 : index
    %147 = vector.load %arg11[%c3_86, %c0_87, %c0_88] : memref<10x16x1xf32, #tpu.memory_space<vmem>>, vector<1x16x1xf32>
    %148 = vector.shape_cast %147 : vector<1x16x1xf32> to vector<16x1xf32>
    %149 = vector.broadcast %148 : vector<16x1xf32> to vector<16x128xf32>
    %150 = arith.mulf %146, %149 : vector<16x128xf32>
    %151 = arith.addf %145, %150 : vector<16x128xf32>
    %c124_i32_89 = arith.constant 124 : i32
    %152 = tpu.dynamic_rotate %1 by %c124_i32_89 dim 1 : vector<16x128xf32>, i32 -> vector<16x128xf32>
    %c4_90 = arith.constant 4 : index
    %c0_91 = arith.constant 0 : index
    %c0_92 = arith.constant 0 : index
    %153 = vector.load %arg11[%c4_90, %c0_91, %c0_92] : memref<10x16x1xf32, #tpu.memory_space<vmem>>, vector<1x16x1xf32>
    %154 = vector.shape_cast %153 : vector<1x16x1xf32> to vector<16x1xf32>
    %155 = vector.broadcast %154 : vector<16x1xf32> to vector<16x128xf32>
    %156 = arith.mulf %152, %155 : vector<16x128xf32>
    %157 = arith.addf %151, %156 : vector<16x128xf32>
    %c123_i32 = arith.constant 123 : i32
    %158 = tpu.dynamic_rotate %1 by %c123_i32 dim 1 : vector<16x128xf32>, i32 -> vector<16x128xf32>
    %c5 = arith.constant 5 : index
    %c0_93 = arith.constant 0 : index
    %c0_94 = arith.constant 0 : index
    %159 = vector.load %arg11[%c5, %c0_93, %c0_94] : memref<10x16x1xf32, #tpu.memory_space<vmem>>, vector<1x16x1xf32>
    %160 = vector.shape_cast %159 : vector<1x16x1xf32> to vector<16x1xf32>
    %161 = vector.broadcast %160 : vector<16x1xf32> to vector<16x128xf32>
    %162 = arith.mulf %158, %161 : vector<16x128xf32>
    %163 = arith.addf %157, %162 : vector<16x128xf32>
    %c122_i32 = arith.constant 122 : i32
    %164 = tpu.dynamic_rotate %1 by %c122_i32 dim 1 : vector<16x128xf32>, i32 -> vector<16x128xf32>
    %c6 = arith.constant 6 : index
    %c0_95 = arith.constant 0 : index
    %c0_96 = arith.constant 0 : index
    %165 = vector.load %arg11[%c6, %c0_95, %c0_96] : memref<10x16x1xf32, #tpu.memory_space<vmem>>, vector<1x16x1xf32>
    %166 = vector.shape_cast %165 : vector<1x16x1xf32> to vector<16x1xf32>
    %167 = vector.broadcast %166 : vector<16x1xf32> to vector<16x128xf32>
    %168 = arith.mulf %164, %167 : vector<16x128xf32>
    %169 = arith.addf %163, %168 : vector<16x128xf32>
    %c121_i32 = arith.constant 121 : i32
    %170 = tpu.dynamic_rotate %1 by %c121_i32 dim 1 : vector<16x128xf32>, i32 -> vector<16x128xf32>
    %c7 = arith.constant 7 : index
    %c0_97 = arith.constant 0 : index
    %c0_98 = arith.constant 0 : index
    %171 = vector.load %arg11[%c7, %c0_97, %c0_98] : memref<10x16x1xf32, #tpu.memory_space<vmem>>, vector<1x16x1xf32>
    %172 = vector.shape_cast %171 : vector<1x16x1xf32> to vector<16x1xf32>
    %173 = vector.broadcast %172 : vector<16x1xf32> to vector<16x128xf32>
    %174 = arith.mulf %170, %173 : vector<16x128xf32>
    %175 = arith.addf %169, %174 : vector<16x128xf32>
    %c120_i32_99 = arith.constant 120 : i32
    %176 = tpu.dynamic_rotate %1 by %c120_i32_99 dim 1 : vector<16x128xf32>, i32 -> vector<16x128xf32>
    %c8 = arith.constant 8 : index
    %c0_100 = arith.constant 0 : index
    %c0_101 = arith.constant 0 : index
    %177 = vector.load %arg11[%c8, %c0_100, %c0_101] : memref<10x16x1xf32, #tpu.memory_space<vmem>>, vector<1x16x1xf32>
    %178 = vector.shape_cast %177 : vector<1x16x1xf32> to vector<16x1xf32>
    %179 = vector.broadcast %178 : vector<16x1xf32> to vector<16x128xf32>
    %180 = arith.mulf %176, %179 : vector<16x128xf32>
    %181 = arith.addf %175, %180 : vector<16x128xf32>
    %c119_i32 = arith.constant 119 : i32
    %182 = tpu.dynamic_rotate %1 by %c119_i32 dim 1 : vector<16x128xf32>, i32 -> vector<16x128xf32>
    %c9 = arith.constant 9 : index
    %c0_102 = arith.constant 0 : index
    %c0_103 = arith.constant 0 : index
    %183 = vector.load %arg11[%c9, %c0_102, %c0_103] : memref<10x16x1xf32, #tpu.memory_space<vmem>>, vector<1x16x1xf32>
    %184 = vector.shape_cast %183 : vector<1x16x1xf32> to vector<16x1xf32>
    %185 = vector.broadcast %184 : vector<16x1xf32> to vector<16x128xf32>
    %186 = arith.mulf %182, %185 : vector<16x128xf32>
    %187 = arith.addf %181, %186 : vector<16x128xf32>
    %cst_104 = arith.constant 0.000000e+00 : f32
    %188 = vector.broadcast %cst_104 : f32 to vector<16x128xf32>
    %189 = arith.maximumf %187, %188 : vector<16x128xf32>
    %c0_105 = arith.constant 0 : index
    %c0_106 = arith.constant 0 : index
    %190 = vector.load %arg14[%c0_105, %c0_106] : memref<16x1xf32, #tpu.memory_space<vmem>>, vector<16x1xf32>
    %c0_107 = arith.constant 0 : index
    %c0_108 = arith.constant 0 : index
    %c0_109 = arith.constant 0 : index
    %191 = vector.load %arg13[%c0_107, %c0_108, %c0_109] : memref<10x16x1xf32, #tpu.memory_space<vmem>>, vector<1x16x1xf32>
    %192 = vector.shape_cast %191 : vector<1x16x1xf32> to vector<16x1xf32>
    %193 = vector.broadcast %192 : vector<16x1xf32> to vector<16x128xf32>
    %194 = arith.mulf %189, %193 : vector<16x128xf32>
    %195 = vector.broadcast %190 : vector<16x1xf32> to vector<16x128xf32>
    %196 = arith.addf %195, %194 : vector<16x128xf32>
    %c127_i32_110 = arith.constant 127 : i32
    %197 = tpu.dynamic_rotate %189 by %c127_i32_110 dim 1 : vector<16x128xf32>, i32 -> vector<16x128xf32>
    %c1_111 = arith.constant 1 : index
    %c0_112 = arith.constant 0 : index
    %c0_113 = arith.constant 0 : index
    %198 = vector.load %arg13[%c1_111, %c0_112, %c0_113] : memref<10x16x1xf32, #tpu.memory_space<vmem>>, vector<1x16x1xf32>
    %199 = vector.shape_cast %198 : vector<1x16x1xf32> to vector<16x1xf32>
    %200 = vector.broadcast %199 : vector<16x1xf32> to vector<16x128xf32>
    %201 = arith.mulf %197, %200 : vector<16x128xf32>
    %202 = arith.addf %196, %201 : vector<16x128xf32>
    %c126_i32_114 = arith.constant 126 : i32
    %203 = tpu.dynamic_rotate %189 by %c126_i32_114 dim 1 : vector<16x128xf32>, i32 -> vector<16x128xf32>
    %c2_115 = arith.constant 2 : index
    %c0_116 = arith.constant 0 : index
    %c0_117 = arith.constant 0 : index
    %204 = vector.load %arg13[%c2_115, %c0_116, %c0_117] : memref<10x16x1xf32, #tpu.memory_space<vmem>>, vector<1x16x1xf32>
    %205 = vector.shape_cast %204 : vector<1x16x1xf32> to vector<16x1xf32>
    %206 = vector.broadcast %205 : vector<16x1xf32> to vector<16x128xf32>
    %207 = arith.mulf %203, %206 : vector<16x128xf32>
    %208 = arith.addf %202, %207 : vector<16x128xf32>
    %c125_i32_118 = arith.constant 125 : i32
    %209 = tpu.dynamic_rotate %189 by %c125_i32_118 dim 1 : vector<16x128xf32>, i32 -> vector<16x128xf32>
    %c3_119 = arith.constant 3 : index
    %c0_120 = arith.constant 0 : index
    %c0_121 = arith.constant 0 : index
    %210 = vector.load %arg13[%c3_119, %c0_120, %c0_121] : memref<10x16x1xf32, #tpu.memory_space<vmem>>, vector<1x16x1xf32>
    %211 = vector.shape_cast %210 : vector<1x16x1xf32> to vector<16x1xf32>
    %212 = vector.broadcast %211 : vector<16x1xf32> to vector<16x128xf32>
    %213 = arith.mulf %209, %212 : vector<16x128xf32>
    %214 = arith.addf %208, %213 : vector<16x128xf32>
    %c124_i32_122 = arith.constant 124 : i32
    %215 = tpu.dynamic_rotate %189 by %c124_i32_122 dim 1 : vector<16x128xf32>, i32 -> vector<16x128xf32>
    %c4_123 = arith.constant 4 : index
    %c0_124 = arith.constant 0 : index
    %c0_125 = arith.constant 0 : index
    %216 = vector.load %arg13[%c4_123, %c0_124, %c0_125] : memref<10x16x1xf32, #tpu.memory_space<vmem>>, vector<1x16x1xf32>
    %217 = vector.shape_cast %216 : vector<1x16x1xf32> to vector<16x1xf32>
    %218 = vector.broadcast %217 : vector<16x1xf32> to vector<16x128xf32>
    %219 = arith.mulf %215, %218 : vector<16x128xf32>
    %220 = arith.addf %214, %219 : vector<16x128xf32>
    %c123_i32_126 = arith.constant 123 : i32
    %221 = tpu.dynamic_rotate %189 by %c123_i32_126 dim 1 : vector<16x128xf32>, i32 -> vector<16x128xf32>
    %c5_127 = arith.constant 5 : index
    %c0_128 = arith.constant 0 : index
    %c0_129 = arith.constant 0 : index
    %222 = vector.load %arg13[%c5_127, %c0_128, %c0_129] : memref<10x16x1xf32, #tpu.memory_space<vmem>>, vector<1x16x1xf32>
    %223 = vector.shape_cast %222 : vector<1x16x1xf32> to vector<16x1xf32>
    %224 = vector.broadcast %223 : vector<16x1xf32> to vector<16x128xf32>
    %225 = arith.mulf %221, %224 : vector<16x128xf32>
    %226 = arith.addf %220, %225 : vector<16x128xf32>
    %c122_i32_130 = arith.constant 122 : i32
    %227 = tpu.dynamic_rotate %189 by %c122_i32_130 dim 1 : vector<16x128xf32>, i32 -> vector<16x128xf32>
    %c6_131 = arith.constant 6 : index
    %c0_132 = arith.constant 0 : index
    %c0_133 = arith.constant 0 : index
    %228 = vector.load %arg13[%c6_131, %c0_132, %c0_133] : memref<10x16x1xf32, #tpu.memory_space<vmem>>, vector<1x16x1xf32>
    %229 = vector.shape_cast %228 : vector<1x16x1xf32> to vector<16x1xf32>
    %230 = vector.broadcast %229 : vector<16x1xf32> to vector<16x128xf32>
    %231 = arith.mulf %227, %230 : vector<16x128xf32>
    %232 = arith.addf %226, %231 : vector<16x128xf32>
    %c121_i32_134 = arith.constant 121 : i32
    %233 = tpu.dynamic_rotate %189 by %c121_i32_134 dim 1 : vector<16x128xf32>, i32 -> vector<16x128xf32>
    %c7_135 = arith.constant 7 : index
    %c0_136 = arith.constant 0 : index
    %c0_137 = arith.constant 0 : index
    %234 = vector.load %arg13[%c7_135, %c0_136, %c0_137] : memref<10x16x1xf32, #tpu.memory_space<vmem>>, vector<1x16x1xf32>
    %235 = vector.shape_cast %234 : vector<1x16x1xf32> to vector<16x1xf32>
    %236 = vector.broadcast %235 : vector<16x1xf32> to vector<16x128xf32>
    %237 = arith.mulf %233, %236 : vector<16x128xf32>
    %238 = arith.addf %232, %237 : vector<16x128xf32>
    %c120_i32_138 = arith.constant 120 : i32
    %239 = tpu.dynamic_rotate %189 by %c120_i32_138 dim 1 : vector<16x128xf32>, i32 -> vector<16x128xf32>
    %c8_139 = arith.constant 8 : index
    %c0_140 = arith.constant 0 : index
    %c0_141 = arith.constant 0 : index
    %240 = vector.load %arg13[%c8_139, %c0_140, %c0_141] : memref<10x16x1xf32, #tpu.memory_space<vmem>>, vector<1x16x1xf32>
    %241 = vector.shape_cast %240 : vector<1x16x1xf32> to vector<16x1xf32>
    %242 = vector.broadcast %241 : vector<16x1xf32> to vector<16x128xf32>
    %243 = arith.mulf %239, %242 : vector<16x128xf32>
    %244 = arith.addf %238, %243 : vector<16x128xf32>
    %c119_i32_142 = arith.constant 119 : i32
    %245 = tpu.dynamic_rotate %189 by %c119_i32_142 dim 1 : vector<16x128xf32>, i32 -> vector<16x128xf32>
    %c9_143 = arith.constant 9 : index
    %c0_144 = arith.constant 0 : index
    %c0_145 = arith.constant 0 : index
    %246 = vector.load %arg13[%c9_143, %c0_144, %c0_145] : memref<10x16x1xf32, #tpu.memory_space<vmem>>, vector<1x16x1xf32>
    %247 = vector.shape_cast %246 : vector<1x16x1xf32> to vector<16x1xf32>
    %248 = vector.broadcast %247 : vector<16x1xf32> to vector<16x128xf32>
    %249 = arith.mulf %245, %248 : vector<16x128xf32>
    %250 = arith.addf %244, %249 : vector<16x128xf32>
    %cst_146 = arith.constant 0.000000e+00 : f32
    %251 = vector.broadcast %cst_146 : f32 to vector<16x128xf32>
    %252 = arith.maximumf %250, %251 : vector<16x128xf32>
    %c110_i32 = arith.constant 110 : i32
    %253 = vector.broadcast %c110_i32 : i32 to vector<16x128xi32>
    %254 = arith.cmpi slt, %2, %253 : vector<16x128xi32>
    %cst_147 = arith.constant 0.000000e+00 : f32
    %255 = vector.broadcast %cst_147 : f32 to vector<16x128xf32>
    %256 = arith.select %254, %252, %255 : vector<16x128xi1>, vector<16x128xf32>
    %cst_148 = arith.constant dense<0.000000e+00> : vector<16xf32>
    %257 = vector.multi_reduction <add>, %256, %cst_148 [1] : vector<16x128xf32> to vector<16xf32>
    %258 = vector.shape_cast %257 : vector<16xf32> to vector<16x1xf32>
    %cst_149 = arith.constant 0.0090909088 : f32
    %259 = vector.broadcast %cst_149 : f32 to vector<16x1xf32>
    %260 = arith.mulf %258, %259 : vector<16x1xf32>
    %261 = tpu.concatenate %52, %126, %260 in 1 : vector<16x1xf32>, vector<16x1xf32>, vector<16x1xf32> -> vector<16x3xf32>
    %c0_150 = arith.constant 0 : index
    %c0_151 = arith.constant 0 : index
    %c0_152 = arith.constant 0 : index
    %262 = vector.load %arg15[%c0_150, %c0_151, %c0_152] : memref<1x16x3xf32, #tpu.memory_space<vmem>>, vector<1x16x3xf32>
    %263 = vector.shape_cast %262 : vector<1x16x3xf32> to vector<16x3xf32>
    %264 = vector.shape_cast %261 : vector<16x3xf32> to vector<1x16x3xf32>
    tpu.vector_store %arg15[%c0_150, %c0_151, %c0_152], %264 {strides = array<i32>} : memref<1x16x3xf32, #tpu.memory_space<vmem>>, vector<1x16x3xf32>,
    return
  }
  func.func @transform_0(%arg0: i32, %arg1: i32) -> (i32, i32, i32) {
    %c0_i32 = arith.constant 0 : i32
    %c0_i32_0 = arith.constant 0 : i32
    return %arg1, %arg0, %c0_i32 : i32, i32, i32
  }
  func.func @transform_1(%arg0: i32, %arg1: i32) -> (i32, i32, i32) {
    %c0_i32 = arith.constant 0 : i32
    %c0_i32_0 = arith.constant 0 : i32
    %c0_i32_1 = arith.constant 0 : i32
    return %c0_i32, %arg0, %c0_i32_0 : i32, i32, i32
  }
  func.func @transform_2(%arg0: i32, %arg1: i32) -> (i32, i32) {
    %c0_i32 = arith.constant 0 : i32
    %c0_i32_0 = arith.constant 0 : i32
    return %arg0, %c0_i32 : i32, i32
  }
  func.func @transform_3(%arg0: i32, %arg1: i32) -> (i32, i32, i32) {
    %c0_i32 = arith.constant 0 : i32
    %c0_i32_0 = arith.constant 0 : i32
    %c0_i32_1 = arith.constant 0 : i32
    return %c0_i32, %arg0, %c0_i32_0 : i32, i32, i32
  }
  func.func @transform_4(%arg0: i32, %arg1: i32) -> (i32, i32) {
    %c0_i32 = arith.constant 0 : i32
    %c0_i32_0 = arith.constant 0 : i32
    return %arg0, %c0_i32 : i32, i32
  }
  func.func @transform_5(%arg0: i32, %arg1: i32) -> (i32, i32, i32) {
    %c0_i32 = arith.constant 0 : i32
    %c0_i32_0 = arith.constant 0 : i32
    %c0_i32_1 = arith.constant 0 : i32
    return %c0_i32, %arg0, %c0_i32_0 : i32, i32, i32
  }
  func.func @transform_6(%arg0: i32, %arg1: i32) -> (i32, i32) {
    %c0_i32 = arith.constant 0 : i32
    %c0_i32_0 = arith.constant 0 : i32
    return %arg0, %c0_i32 : i32, i32
  }
  func.func @transform_7(%arg0: i32, %arg1: i32) -> (i32, i32, i32) {
    %c0_i32 = arith.constant 0 : i32
    %c0_i32_0 = arith.constant 0 : i32
    %c0_i32_1 = arith.constant 0 : i32
    return %c0_i32, %arg0, %c0_i32_0 : i32, i32, i32
  }
  func.func @transform_8(%arg0: i32, %arg1: i32) -> (i32, i32) {
    %c0_i32 = arith.constant 0 : i32
    %c0_i32_0 = arith.constant 0 : i32
    return %arg0, %c0_i32 : i32, i32
  }
  func.func @transform_9(%arg0: i32, %arg1: i32) -> (i32, i32, i32) {
    %c0_i32 = arith.constant 0 : i32
    %c0_i32_0 = arith.constant 0 : i32
    %c0_i32_1 = arith.constant 0 : i32
    return %c0_i32, %arg0, %c0_i32_0 : i32, i32, i32
  }
  func.func @transform_10(%arg0: i32, %arg1: i32) -> (i32, i32) {
    %c0_i32 = arith.constant 0 : i32
    %c0_i32_0 = arith.constant 0 : i32
    return %arg0, %c0_i32 : i32, i32
  }
  func.func @transform_11(%arg0: i32, %arg1: i32) -> (i32, i32, i32) {
    %c0_i32 = arith.constant 0 : i32
    %c0_i32_0 = arith.constant 0 : i32
    %c0_i32_1 = arith.constant 0 : i32
    return %c0_i32, %arg0, %c0_i32_0 : i32, i32, i32
  }
  func.func @transform_12(%arg0: i32, %arg1: i32) -> (i32, i32) {
    %c0_i32 = arith.constant 0 : i32
    %c0_i32_0 = arith.constant 0 : i32
    return %arg0, %c0_i32 : i32, i32
  }
  func.func @transform_13(%arg0: i32, %arg1: i32) -> (i32, i32, i32) {
    %c0_i32 = arith.constant 0 : i32
    %c0_i32_0 = arith.constant 0 : i32
    return %arg1, %arg0, %c0_i32 : i32, i32, i32
  }
}

</mosaic_0001>

<llo_original>
// kernel: tpu_custom_call.1
$region0: #{tpu_custom_call.1}
  #allocation0 [shape = 'u32[]', space=smem, size = 0x4, offset = 0x4, fixed_abs, tag = 'smem constant byte address 0x4 - core index']
  #allocation1 [shape = 'u32[144,128]{1,0:T(1,128)}', space=vmem, size = 0x12000, scoped, tag = 'internal scratch']
  %s0 = inlined_call_operand.vmem [shape: f32[2,16,128], index: 0, kind: input, shape index: {}]
  %s1 = inlined_call_operand.vmem [shape: f32[3,16,1], index: 1, kind: input, shape index: {}]
  %s2 = inlined_call_operand.vmem [shape: f32[16,1], index: 2, kind: input, shape index: {}]
  %s3 = inlined_call_operand.vmem [shape: f32[3,16,1], index: 3, kind: input, shape index: {}]
  %s4 = inlined_call_operand.vmem [shape: f32[16,1], index: 4, kind: input, shape index: {}]
  %s5 = inlined_call_operand.vmem [shape: f32[5,16,1], index: 5, kind: input, shape index: {}]
  %s6 = inlined_call_operand.vmem [shape: f32[16,1], index: 6, kind: input, shape index: {}]
  %s7 = inlined_call_operand.vmem [shape: f32[5,16,1], index: 7, kind: input, shape index: {}]
  %s8 = inlined_call_operand.vmem [shape: f32[16,1], index: 8, kind: input, shape index: {}]
  %s9 = inlined_call_operand.vmem [shape: f32[10,16,1], index: 9, kind: input, shape index: {}]
  %s10 = inlined_call_operand.vmem [shape: f32[16,1], index: 10, kind: input, shape index: {}]
  %s11 = inlined_call_operand.vmem [shape: f32[10,16,1], index: 11, kind: input, shape index: {}]
  %s12 = inlined_call_operand.vmem [shape: f32[16,1], index: 12, kind: input, shape index: {}]
  %s13 = inlined_call_operand.vmem [shape: f32[2,16,3], index: 13, kind: output, shape index: {}]
  %s14 = sld [smem:[#allocation0]]
  $region85: #{tpu_custom_call.1} parent=0
    _
  %s16 = ssub.s32 1, %s14
  %s17 = scalar_select 0, %s16, %s14
  loop: start=0, step=1, limit=4
  $region2: #{tpu_custom_call.1} parent=0 // loop_pre_header
    _
  $region3: #{tpu_custom_call.1} parent=0 // loop_header
    %s19 = sphi 0, %s23
    %p20 = scmp.ge.s32.totalorder %s19, 4
    %s26 = sphi 0, %s38
    %s27 = sphi 0, %s34
    %s28 = sphi 0, %s26
    %s29 = sphi 0, %s27
    %s30 = sphi 0, %s28
    %s31 = sphi 0, %s29
    %s43 = sphi 0, %s45
    %s46 = sphi 0, %s43
    %s47 = sphi 0, %s46
    %s63 = sphi 0, %s47
    %s69 = sphi 0, %s71
    %s72 = sphi 0, %s69
    %s73 = sphi 0, %s72
    %s89 = sphi 0, %s73
    %s95 = sphi 0, %s97
    %s98 = sphi 0, %s95
    %s99 = sphi 0, %s98
    %s115 = sphi 0, %s99
    %s121 = sphi 0, %s123
    %s124 = sphi 0, %s121
    %s125 = sphi 0, %s124
    %s141 = sphi 0, %s125
    %s147 = sphi 0, %s149
    %s150 = sphi 0, %s147
    %s151 = sphi 0, %s150
    %s167 = sphi 0, %s151
    %s173 = sphi 0, %s175
    %s176 = sphi 0, %s173
    %s177 = sphi 0, %s176
    %s193 = sphi 0, %s177
    %s199 = sphi 0, %s201
    %s202 = sphi 0, %s199
    %s203 = sphi 0, %s202
    %s219 = sphi 0, %s203
    %s225 = sphi 0, %s227
    %s228 = sphi 0, %s225
    %s229 = sphi 0, %s228
    %s245 = sphi 0, %s229
    %s251 = sphi 0, %s253
    %s254 = sphi 0, %s251
    %s255 = sphi 0, %s254
    %s271 = sphi 0, %s255
    %s277 = sphi 0, %s279
    %s280 = sphi 0, %s277
    %s281 = sphi 0, %s280
    %s297 = sphi 0, %s281
    %s303 = sphi 0, %s305
    %s306 = sphi 0, %s303
    %s307 = sphi 0, %s306
    %s323 = sphi 0, %s307
    %s329 = sphi 0, %s331
    %s332 = sphi 0, %s329
    %s333 = sphi 0, %s332
    %s349 = sphi 0, %s333
    %s355 = sphi 0, %s357
    %s358 = sphi 0, %s355
    %s359 = sphi 0, %s358
    %s375 = sphi 0, %s359
    %s383 = sphi 0, %s385
    %s386 = sphi 0, %s383
    %s387 = sphi 0, %s386
    %s403 = sphi 0, %s387
  $region4: #{tpu_custom_call.1} parent=0 // loop_header_branch
    %22 = sbr.rel (%p20) target = $region8
  $region5: #{tpu_custom_call.1} parent=0 // loop_body
    %s24 = ssub.s32 %s19, 1
    %s25 = ssub.s32 %s19, 2
    %s32 = sadd.s32 1, %s27
    %p33 = scmp.ge.s32.totalorder %s32, 2
    %s34 = scalar_select %p33, 0, %s32
    %s35 = sadd.s32 1, %s26
    %s36 = scalar_select %p33, %s35, %s26
    %p37 = scmp.ge.s32.totalorder %s36, 1
    %s38 = scalar_select %p37, 0, %s36
    %s39 = ssub.s32 %s27, %s34
    %s40 = ssub.s32 %s26, %s38
    %s41 = sor.u32 %s39, %s40
    %p42 = scmp.eq.s32.totalorder %s41, 0
    %s44 = sadd.s32 %s43, 1
    %s45 = scalar_select %p42, %s43, %s44
    %p48 = pneg %p42
    %p49 = scmp.eq.s32.totalorder %s19, 1
    %p50 = por %p48, %p49
    %p51 = scmp.ne.s32.totalorder %s43, %s46
    %p52 = scmp.eq.s32.totalorder %s19, 0
    %p53 = por %p51, %p52
    %p54 = scmp.ne.s32.totalorder %s43, %s46
    %p55 = scmp.eq.s32.totalorder %s24, 1
    %p56 = por %p54, %p55
    %p57 = scmp.ne.s32.totalorder %s46, %s47
    %p58 = scmp.eq.s32.totalorder %s24, 0
    %p59 = por %p57, %p58
    %p60 = scmp.ne.s32.totalorder %s46, %s47
    %p61 = scmp.eq.s32.totalorder %s25, 1
    %p62 = por %p60, %p61
    %p64 = scmp.ne.s32.totalorder %s47, %s63
    %p65 = scmp.eq.s32.totalorder %s25, 0
    %p66 = por %p64, %p65
    %s67 = ssub.s32 %s26, %s38
    %p68 = scmp.eq.s32.totalorder %s67, 0
    %s70 = sadd.s32 %s69, 1
    %s71 = scalar_select %p68, %s69, %s70
    %p74 = pneg %p68
    %p75 = scmp.eq.s32.totalorder %s19, 1
    %p76 = por %p74, %p75
    %p77 = scmp.ne.s32.totalorder %s69, %s72
    %p78 = scmp.eq.s32.totalorder %s19, 0
    %p79 = por %p77, %p78
    %p80 = scmp.ne.s32.totalorder %s69, %s72
    %p81 = scmp.eq.s32.totalorder %s24, 1
    %p82 = por %p80, %p81
    %p83 = scmp.ne.s32.totalorder %s72, %s73
    %p84 = scmp.eq.s32.totalorder %s24, 0
    %p85 = por %p83, %p84
    %p86 = scmp.ne.s32.totalorder %s72, %s73
    %p87 = scmp.eq.s32.totalorder %s25, 1
    %p88 = por %p86, %p87
    %p90 = scmp.ne.s32.totalorder %s73, %s89
    %p91 = scmp.eq.s32.totalorder %s25, 0
    %p92 = por %p90, %p91
    %s93 = ssub.s32 %s26, %s38
    %p94 = scmp.eq.s32.totalorder %s93, 0
    %s96 = sadd.s32 %s95, 1
    %s97 = scalar_select %p94, %s95, %s96
    %p100 = pneg %p94
    %p101 = scmp.eq.s32.totalorder %s19, 1
    %p102 = por %p100, %p101
    %p103 = scmp.ne.s32.totalorder %s95, %s98
    %p104 = scmp.eq.s32.totalorder %s19, 0
    %p105 = por %p103, %p104
    %p106 = scmp.ne.s32.totalorder %s95, %s98
    %p107 = scmp.eq.s32.totalorder %s24, 1
    %p108 = por %p106, %p107
    %p109 = scmp.ne.s32.totalorder %s98, %s99
    %p110 = scmp.eq.s32.totalorder %s24, 0
    %p111 = por %p109, %p110
    %p112 = scmp.ne.s32.totalorder %s98, %s99
    %p113 = scmp.eq.s32.totalorder %s25, 1
    %p114 = por %p112, %p113
    %p116 = scmp.ne.s32.totalorder %s99, %s115
    %p117 = scmp.eq.s32.totalorder %s25, 0
    %p118 = por %p116, %p117
    %s119 = ssub.s32 %s26, %s38
    %p120 = scmp.eq.s32.totalorder %s119, 0
    %s122 = sadd.s32 %s121, 1
    %s123 = scalar_select %p120, %s121, %s122
    %p126 = pneg %p120
    %p127 = scmp.eq.s32.totalorder %s19, 1
    %p128 = por %p126, %p127
    %p129 = scmp.ne.s32.totalorder %s121, %s124
    %p130 = scmp.eq.s32.totalorder %s19, 0
    %p131 = por %p129, %p130
    %p132 = scmp.ne.s32.totalorder %s121, %s124
    %p133 = scmp.eq.s32.totalorder %s24, 1
    %p134 = por %p132, %p133
    %p135 = scmp.ne.s32.totalorder %s124, %s125
    %p136 = scmp.eq.s32.totalorder %s24, 0
    %p137 = por %p135, %p136
    %p138 = scmp.ne.s32.totalorder %s124, %s125
    %p139 = scmp.eq.s32.totalorder %s25, 1
    %p140 = por %p138, %p139
    %p142 = scmp.ne.s32.totalorder %s125, %s141
    %p143 = scmp.eq.s32.totalorder %s25, 0
    %p144 = por %p142, %p143
    %s145 = ssub.s32 %s26, %s38
    %p146 = scmp.eq.s32.totalorder %s145, 0
    %s148 = sadd.s32 %s147, 1
    %s149 = scalar_select %p146, %s147, %s148
    %p152 = pneg %p146
    %p153 = scmp.eq.s32.totalorder %s19, 1
    %p154 = por %p152, %p153
    %p155 = scmp.ne.s32.totalorder %s147, %s150
    %p156 = scmp.eq.s32.totalorder %s19, 0
    %p157 = por %p155, %p156
    %p158 = scmp.ne.s32.totalorder %s147, %s150
    %p159 = scmp.eq.s32.totalorder %s24, 1
    %p160 = por %p158, %p159
    %p161 = scmp.ne.s32.totalorder %s150, %s151
    %p162 = scmp.eq.s32.totalorder %s24, 0
    %p163 = por %p161, %p162
    %p164 = scmp.ne.s32.totalorder %s150, %s151
    %p165 = scmp.eq.s32.totalorder %s25, 1
    %p166 = por %p164, %p165
    %p168 = scmp.ne.s32.totalorder %s151, %s167
    %p169 = scmp.eq.s32.totalorder %s25, 0
    %p170 = por %p168, %p169
    %s171 = ssub.s32 %s26, %s38
    %p172 = scmp.eq.s32.totalorder %s171, 0
    %s174 = sadd.s32 %s173, 1
    %s175 = scalar_select %p172, %s173, %s174
    %p178 = pneg %p172
    %p179 = scmp.eq.s32.totalorder %s19, 1
    %p180 = por %p178, %p179
    %p181 = scmp.ne.s32.totalorder %s173, %s176
    %p182 = scmp.eq.s32.totalorder %s19, 0
    %p183 = por %p181, %p182
    %p184 = scmp.ne.s32.totalorder %s173, %s176
    %p185 = scmp.eq.s32.totalorder %s24, 1
    %p186 = por %p184, %p185
    %p187 = scmp.ne.s32.totalorder %s176, %s177
    %p188 = scmp.eq.s32.totalorder %s24, 0
    %p189 = por %p187, %p188
    %p190 = scmp.ne.s32.totalorder %s176, %s177
    %p191 = scmp.eq.s32.totalorder %s25, 1
    %p192 = por %p190, %p191
    %p194 = scmp.ne.s32.totalorder %s177, %s193
    %p195 = scmp.eq.s32.totalorder %s25, 0
    %p196 = por %p194, %p195
    %s197 = ssub.s32 %s26, %s38
    %p198 = scmp.eq.s32.totalorder %s197, 0
    %s200 = sadd.s32 %s199, 1
    %s201 = scalar_select %p198, %s199, %s200
    %p204 = pneg %p198
    %p205 = scmp.eq.s32.totalorder %s19, 1
    %p206 = por %p204, %p205
    %p207 = scmp.ne.s32.totalorder %s199, %s202
    %p208 = scmp.eq.s32.totalorder %s19, 0
    %p209 = por %p207, %p208
    %p210 = scmp.ne.s32.totalorder %s199, %s202
    %p211 = scmp.eq.s32.totalorder %s24, 1
    %p212 = por %p210, %p211
    %p213 = scmp.ne.s32.totalorder %s202, %s203
    %p214 = scmp.eq.s32.totalorder %s24, 0
    %p215 = por %p213, %p214
    %p216 = scmp.ne.s32.totalorder %s202, %s203
    %p217 = scmp.eq.s32.totalorder %s25, 1
    %p218 = por %p216, %p217
    %p220 = scmp.ne.s32.totalorder %s203, %s219
    %p221 = scmp.eq.s32.totalorder %s25, 0
    %p222 = por %p220, %p221
    %s223 = ssub.s32 %s26, %s38
    %p224 = scmp.eq.s32.totalorder %s223, 0
    %s226 = sadd.s32 %s225, 1
    %s227 = scalar_select %p224, %s225, %s226
    %p230 = pneg %p224
    %p231 = scmp.eq.s32.totalorder %s19, 1
    %p232 = por %p230, %p231
    %p233 = scmp.ne.s32.totalorder %s225, %s228
    %p234 = scmp.eq.s32.totalorder %s19, 0
    %p235 = por %p233, %p234
    %p236 = scmp.ne.s32.totalorder %s225, %s228
    %p237 = scmp.eq.s32.totalorder %s24, 1
    %p238 = por %p236, %p237
    %p239 = scmp.ne.s32.totalorder %s228, %s229
    %p240 = scmp.eq.s32.totalorder %s24, 0
    %p241 = por %p239, %p240
    %p242 = scmp.ne.s32.totalorder %s228, %s229
    %p243 = scmp.eq.s32.totalorder %s25, 1
    %p244 = por %p242, %p243
    %p246 = scmp.ne.s32.totalorder %s229, %s245
    %p247 = scmp.eq.s32.totalorder %s25, 0
    %p248 = por %p246, %p247
    %s249 = ssub.s32 %s26, %s38
    %p250 = scmp.eq.s32.totalorder %s249, 0
    %s252 = sadd.s32 %s251, 1
    %s253 = scalar_select %p250, %s251, %s252
    %p256 = pneg %p250
    %p257 = scmp.eq.s32.totalorder %s19, 1
    %p258 = por %p256, %p257
    %p259 = scmp.ne.s32.totalorder %s251, %s254
    %p260 = scmp.eq.s32.totalorder %s19, 0
    %p261 = por %p259, %p260
    %p262 = scmp.ne.s32.totalorder %s251, %s254
    %p263 = scmp.eq.s32.totalorder %s24, 1
    %p264 = por %p262, %p263
    %p265 = scmp.ne.s32.totalorder %s254, %s255
    %p266 = scmp.eq.s32.totalorder %s24, 0
    %p267 = por %p265, %p266
    %p268 = scmp.ne.s32.totalorder %s254, %s255
    %p269 = scmp.eq.s32.totalorder %s25, 1
    %p270 = por %p268, %p269
    %p272 = scmp.ne.s32.totalorder %s255, %s271
    %p273 = scmp.eq.s32.totalorder %s25, 0
    %p274 = por %p272, %p273
    %s275 = ssub.s32 %s26, %s38
    %p276 = scmp.eq.s32.totalorder %s275, 0
    %s278 = sadd.s32 %s277, 1
    %s279 = scalar_select %p276, %s277, %s278
    %p282 = pneg %p276
    %p283 = scmp.eq.s32.totalorder %s19, 1
    %p284 = por %p282, %p283
    %p285 = scmp.ne.s32.totalorder %s277, %s280
    %p286 = scmp.eq.s32.totalorder %s19, 0
    %p287 = por %p285, %p286
    %p288 = scmp.ne.s32.totalorder %s277, %s280
    %p289 = scmp.eq.s32.totalorder %s24, 1
    %p290 = por %p288, %p289
    %p291 = scmp.ne.s32.totalorder %s280, %s281
    %p292 = scmp.eq.s32.totalorder %s24, 0
    %p293 = por %p291, %p292
    %p294 = scmp.ne.s32.totalorder %s280, %s281
    %p295 = scmp.eq.s32.totalorder %s25, 1
    %p296 = por %p294, %p295
    %p298 = scmp.ne.s32.totalorder %s281, %s297
    %p299 = scmp.eq.s32.totalorder %s25, 0
    %p300 = por %p298, %p299
    %s301 = ssub.s32 %s26, %s38
    %p302 = scmp.eq.s32.totalorder %s301, 0
    %s304 = sadd.s32 %s303, 1
    %s305 = scalar_select %p302, %s303, %s304
    %p308 = pneg %p302
    %p309 = scmp.eq.s32.totalorder %s19, 1
    %p310 = por %p308, %p309
    %p311 = scmp.ne.s32.totalorder %s303, %s306
    %p312 = scmp.eq.s32.totalorder %s19, 0
    %p313 = por %p311, %p312
    %p314 = scmp.ne.s32.totalorder %s303, %s306
    %p315 = scmp.eq.s32.totalorder %s24, 1
    %p316 = por %p314, %p315
    %p317 = scmp.ne.s32.totalorder %s306, %s307
    %p318 = scmp.eq.s32.totalorder %s24, 0
    %p319 = por %p317, %p318
    %p320 = scmp.ne.s32.totalorder %s306, %s307
    %p321 = scmp.eq.s32.totalorder %s25, 1
    %p322 = por %p320, %p321
    %p324 = scmp.ne.s32.totalorder %s307, %s323
    %p325 = scmp.eq.s32.totalorder %s25, 0
    %p326 = por %p324, %p325
    %s327 = ssub.s32 %s26, %s38
    %p328 = scmp.eq.s32.totalorder %s327, 0
    %s330 = sadd.s32 %s329, 1
    %s331 = scalar_select %p328, %s329, %s330
    %p334 = pneg %p328
    %p335 = scmp.eq.s32.totalorder %s19, 1
    %p336 = por %p334, %p335
    %p337 = scmp.ne.s32.totalorder %s329, %s332
    %p338 = scmp.eq.s32.totalorder %s19, 0
    %p339 = por %p337, %p338
    %p340 = scmp.ne.s32.totalorder %s329, %s332
    %p341 = scmp.eq.s32.totalorder %s24, 1
    %p342 = por %p340, %p341
    %p343 = scmp.ne.s32.totalorder %s332, %s333
    %p344 = scmp.eq.s32.totalorder %s24, 0
    %p345 = por %p343, %p344
    %p346 = scmp.ne.s32.totalorder %s332, %s333
    %p347 = scmp.eq.s32.totalorder %s25, 1
    %p348 = por %p346, %p347
    %p350 = scmp.ne.s32.totalorder %s333, %s349
    %p351 = scmp.eq.s32.totalorder %s25, 0
    %p352 = por %p350, %p351
    %s353 = ssub.s32 %s26, %s38
    %p354 = scmp.eq.s32.totalorder %s353, 0
    %s356 = sadd.s32 %s355, 1
    %s357 = scalar_select %p354, %s355, %s356
    %p360 = pneg %p354
    %p361 = scmp.eq.s32.totalorder %s19, 1
    %p362 = por %p360, %p361
    %p363 = scmp.ne.s32.totalorder %s355, %s358
    %p364 = scmp.eq.s32.totalorder %s19, 0
    %p365 = por %p363, %p364
    %p366 = scmp.ne.s32.totalorder %s355, %s358
    %p367 = scmp.eq.s32.totalorder %s24, 1
    %p368 = por %p366, %p367
    %p369 = scmp.ne.s32.totalorder %s358, %s359
    %p370 = scmp.eq.s32.totalorder %s24, 0
    %p371 = por %p369, %p370
    %p372 = scmp.ne.s32.totalorder %s358, %s359
    %p373 = scmp.eq.s32.totalorder %s25, 1
    %p374 = por %p372, %p373
    %p376 = scmp.ne.s32.totalorder %s359, %s375
    %p377 = scmp.eq.s32.totalorder %s25, 0
    %p378 = por %p376, %p377
    %s379 = ssub.s32 %s27, %s34
    %s380 = ssub.s32 %s26, %s38
    %s381 = sor.u32 %s379, %s380
    %p382 = scmp.eq.s32.totalorder %s381, 0
    %s384 = sadd.s32 %s383, 1
    %s385 = scalar_select %p382, %s383, %s384
    %p388 = pneg %p382
    %p389 = scmp.eq.s32.totalorder %s19, 1
    %p390 = por %p388, %p389
    %p391 = scmp.ne.s32.totalorder %s383, %s386
    %p392 = scmp.eq.s32.totalorder %s19, 0
    %p393 = por %p391, %p392
    %p394 = scmp.ne.s32.totalorder %s383, %s386
    %p395 = scmp.eq.s32.totalorder %s24, 1
    %p396 = por %p394, %p395
    %p397 = scmp.ne.s32.totalorder %s386, %s387
    %p398 = scmp.eq.s32.totalorder %s24, 0
    %p399 = por %p397, %p398
    %p400 = scmp.ne.s32.totalorder %s386, %s387
    %p401 = scmp.eq.s32.totalorder %s25, 1
    %p402 = por %p400, %p401
    %p404 = scmp.ne.s32.totalorder %s387, %s403
    %p405 = scmp.eq.s32.totalorder %s25, 0
    %p406 = por %p404, %p405
    %p407 = scmp.le.s32.totalorder 1, %s19
    %p408 = scmp.lt.s32.totalorder %s19, 3
    %p409 = pnand %p407, %p408
    %p410 = pneg %p409
    // Predicated region
    $region9: #{tpu_custom_call.1} parent=5 // pred_check
      _
    $region10: #{tpu_custom_call.1} parent=5 // pred_check_branch
      %412 = sbr.rel (%p409) target = $region12
    $region11: #{tpu_custom_call.1} parent=5 // pred_region
      %s413 = ssub.s32 %s19, 1
      // Predicated region
      $region13: #{tpu_custom_call.1} parent=11 // pred_check
        %p414 = pneg %p85
      $region14: #{tpu_custom_call.1} parent=11 // pred_check_branch
        %416 = sbr.rel (%p414) target = $region16
      $region15: #{tpu_custom_call.1} parent=11 // pred_region
        %s417 = smul.u32 2, %s28
        %p418 = scmp.lt.s32.totalorder %s417, 1
        %s419 = scalar_select %p418, %s417, 1
        %s420 = smul.addr %s419, 8
        %s421 = scalar_lea.vmem %s1, %s420
        %s422 = smul.u32 2, %s28
      $region16: #{tpu_custom_call.1} parent=11 // pred_fallthru
        _
      // Predicated region
      $region17: #{tpu_custom_call.1} parent=11 // pred_check
        %p423 = pneg %p111
      $region18: #{tpu_custom_call.1} parent=11 // pred_check_branch
        %425 = sbr.rel (%p423) target = $region20
      $region19: #{tpu_custom_call.1} parent=11 // pred_region
        %s426 = smul.u32 2, %s28
        %p427 = scmp.lt.s32.totalorder %s426, 1
        %s428 = scalar_select %p427, %s426, 1
        %s429 = smul.addr %s428, 8
        %s430 = scalar_lea.vmem %s2, %s429
        %s431 = smul.u32 2, %s28
      $region20: #{tpu_custom_call.1} parent=11 // pred_fallthru
        _
      // Predicated region
      $region21: #{tpu_custom_call.1} parent=11 // pred_check
        %p432 = pneg %p137
      $region22: #{tpu_custom_call.1} parent=11 // pred_check_branch
        %434 = sbr.rel (%p432) target = $region24
      $region23: #{tpu_custom_call.1} parent=11 // pred_region
        %s435 = smul.u32 2, %s28
        %p436 = scmp.lt.s32.totalorder %s435, 1
        %s437 = scalar_select %p436, %s435, 1
        %s438 = smul.addr %s437, 8
        %s439 = scalar_lea.vmem %s3, %s438
        %s440 = smul.u32 2, %s28
      $region24: #{tpu_custom_call.1} parent=11 // pred_fallthru
        _
      // Predicated region
      $region25: #{tpu_custom_call.1} parent=11 // pred_check
        %p441 = pneg %p163
      $region26: #{tpu_custom_call.1} parent=11 // pred_check_branch
        %443 = sbr.rel (%p441) target = $region28
      $region27: #{tpu_custom_call.1} parent=11 // pred_region
        %s444 = smul.u32 2, %s28
        %p445 = scmp.lt.s32.totalorder %s444, 1
        %s446 = scalar_select %p445, %s444, 1
        %s447 = smul.addr %s446, 8
        %s448 = scalar_lea.vmem %s4, %s447
        %s449 = smul.u32 2, %s28
      $region28: #{tpu_custom_call.1} parent=11 // pred_fallthru
        _
      // Predicated region
      $region29: #{tpu_custom_call.1} parent=11 // pred_check
        %p450 = pneg %p189
      $region30: #{tpu_custom_call.1} parent=11 // pred_check_branch
        %452 = sbr.rel (%p450) target = $region32
      $region31: #{tpu_custom_call.1} parent=11 // pred_region
        %s453 = smul.u32 2, %s28
        %p454 = scmp.lt.s32.totalorder %s453, 1
        %s455 = scalar_select %p454, %s453, 1
        %s456 = smul.addr %s455, 8
        %s457 = scalar_lea.vmem %s5, %s456
        %s458 = smul.u32 2, %s28
      $region32: #{tpu_custom_call.1} parent=11 // pred_fallthru
        _
      // Predicated region
      $region33: #{tpu_custom_call.1} parent=11 // pred_check
        %p459 = pneg %p215
      $region34: #{tpu_custom_call.1} parent=11 // pred_check_branch
        %461 = sbr.rel (%p459) target = $region36
      $region35: #{tpu_custom_call.1} parent=11 // pred_region
        %s462 = smul.u32 2, %s28
        %p463 = scmp.lt.s32.totalorder %s462, 1
        %s464 = scalar_select %p463, %s462, 1
        %s465 = smul.addr %s464, 8
        %s466 = scalar_lea.vmem %s6, %s465
        %s467 = smul.u32 2, %s28
      $region36: #{tpu_custom_call.1} parent=11 // pred_fallthru
        _
      // Predicated region
      $region37: #{tpu_custom_call.1} parent=11 // pred_check
        %p468 = pneg %p241
      $region38: #{tpu_custom_call.1} parent=11 // pred_check_branch
        %470 = sbr.rel (%p468) target = $region40
      $region39: #{tpu_custom_call.1} parent=11 // pred_region
        %s471 = smul.u32 2, %s28
        %p472 = scmp.lt.s32.totalorder %s471, 1
        %s473 = scalar_select %p472, %s471, 1
        %s474 = smul.addr %s473, 8
        %s475 = scalar_lea.vmem %s7, %s474
        %s476 = smul.u32 2, %s28
      $region40: #{tpu_custom_call.1} parent=11 // pred_fallthru
        _
      // Predicated region
      $region41: #{tpu_custom_call.1} parent=11 // pred_check
        %p477 = pneg %p267
      $region42: #{tpu_custom_call.1} parent=11 // pred_check_branch
        %479 = sbr.rel (%p477) target = $region44
      $region43: #{tpu_custom_call.1} parent=11 // pred_region
        %s480 = smul.u32 2, %s28
        %p481 = scmp.lt.s32.totalorder %s480, 1
        %s482 = scalar_select %p481, %s480, 1
        %s483 = smul.addr %s482, 8
        %s484 = scalar_lea.vmem %s8, %s483
        %s485 = smul.u32 2, %s28
      $region44: #{tpu_custom_call.1} parent=11 // pred_fallthru
        _
      // Predicated region
      $region45: #{tpu_custom_call.1} parent=11 // pred_check
        %p486 = pneg %p293
      $region46: #{tpu_custom_call.1} parent=11 // pred_check_branch
        %488 = sbr.rel (%p486) target = $region48
      $region47: #{tpu_custom_call.1} parent=11 // pred_region
        %s489 = smul.u32 2, %s28
        %p490 = scmp.lt.s32.totalorder %s489, 1
        %s491 = scalar_select %p490, %s489, 1
        %s492 = smul.addr %s491, 8
        %s493 = scalar_lea.vmem %s9, %s492
        %s494 = smul.u32 2, %s28
      $region48: #{tpu_custom_call.1} parent=11 // pred_fallthru
        _
      // Predicated region
      $region49: #{tpu_custom_call.1} parent=11 // pred_check
        %p495 = pneg %p319
      $region50: #{tpu_custom_call.1} parent=11 // pred_check_branch
        %497 = sbr.rel (%p495) target = $region52
      $region51: #{tpu_custom_call.1} parent=11 // pred_region
        %s498 = smul.u32 2, %s28
        %p499 = scmp.lt.s32.totalorder %s498, 1
        %s500 = scalar_select %p499, %s498, 1
        %s501 = smul.addr %s500, 8
        %s502 = scalar_lea.vmem %s10, %s501
        %s503 = smul.u32 2, %s28
      $region52: #{tpu_custom_call.1} parent=11 // pred_fallthru
        _
      // Predicated region
      $region53: #{tpu_custom_call.1} parent=11 // pred_check
        %p504 = pneg %p345
      $region54: #{tpu_custom_call.1} parent=11 // pred_check_branch
        %506 = sbr.rel (%p504) target = $region56
      $region55: #{tpu_custom_call.1} parent=11 // pred_region
        %s507 = smul.u32 2, %s28
        %p508 = scmp.lt.s32.totalorder %s507, 1
        %s509 = scalar_select %p508, %s507, 1
        %s510 = smul.addr %s509, 8
        %s511 = scalar_lea.vmem %s11, %s510
        %s512 = smul.u32 2, %s28
      $region56: #{tpu_custom_call.1} parent=11 // pred_fallthru
        _
      // Predicated region
      $region57: #{tpu_custom_call.1} parent=11 // pred_check
        %p513 = pneg %p371
      $region58: #{tpu_custom_call.1} parent=11 // pred_check_branch
        %515 = sbr.rel (%p513) target = $region60
      $region59: #{tpu_custom_call.1} parent=11 // pred_region
        %s516 = smul.u32 2, %s28
        %p517 = scmp.lt.s32.totalorder %s516, 1
        %s518 = scalar_select %p517, %s516, 1
        %s519 = smul.addr %s518, 8
        %s520 = scalar_lea.vmem %s12, %s519
        %s521 = smul.u32 2, %s28
      $region60: #{tpu_custom_call.1} parent=11 // pred_fallthru
        _
    $region12: #{tpu_custom_call.1} parent=5 // pred_fallthru
      _
    %p522 = scmp.lt.s32.totalorder %s19, 2
    // Predicated region
    $region61: #{tpu_custom_call.1} parent=5 // pred_check
      %p523 = pneg %p522
    $region62: #{tpu_custom_call.1} parent=5 // pred_check_branch
      %525 = sbr.rel (%p523) target = $region64
    $region63: #{tpu_custom_call.1} parent=5 // pred_region
      // Predicated region
      $region65: #{tpu_custom_call.1} parent=63 // pred_check
        %p526 = pneg %p53
      $region66: #{tpu_custom_call.1} parent=63 // pred_check_branch
        %528 = sbr.rel (%p526) target = $region68
      $region67: #{tpu_custom_call.1} parent=63 // pred_region
        %s529 = smul.u32 2, %s26
        %p530 = scmp.lt.s32.totalorder %s27, 1
        %s531 = scalar_select %p530, %s27, 1
        %p532 = scmp.lt.s32.totalorder %s529, 1
        %s533 = scalar_select %p532, %s529, 1
        %s534 = smul.addr %s531, 2
        %s535 = sadd.s32 %s533, %s534
        %s536 = smul.addr %s535, 8
        %s537 = scalar_lea.vmem %s0, %s536
        %s538 = smul.u32 2, %s26
      $region68: #{tpu_custom_call.1} parent=63 // pred_fallthru
        _
    $region64: #{tpu_custom_call.1} parent=5 // pred_fallthru
      _
    %p539 = scmp.le.s32.totalorder 1, %s19
    %p540 = scmp.lt.s32.totalorder %s19, 3
    %p541 = pnand %p539, %p540
    %p542 = pneg %p541
    // Predicated region
    $region69: #{tpu_custom_call.1} parent=5 // pred_check
      _
    $region70: #{tpu_custom_call.1} parent=5 // pred_check_branch
      %544 = sbr.rel (%p541) target = $region72
    $region71: #{tpu_custom_call.1} parent=5 // pred_region
      %s545 = ssub.s32 %s19, 1
      %s546 = smul.u32 2, %s28
      %p547 = scmp.lt.s32.totalorder %s29, 1
      %s548 = scalar_select %p547, %s29, 1
      %p549 = scmp.lt.s32.totalorder %s546, 1
      %s550 = scalar_select %p549, %s546, 1
      %s551 = smul.addr %s548, 2
      %s552 = sadd.s32 %s550, %s551
      %s553 = smul.addr %s552, 8
      %s554 = scalar_lea.vmem %s0, %s553
      %p555 = pneg %p59
      %p556 = pneg %p56
      %s557 = smul.u32 2, %s28
      %p558 = scmp.lt.s32.totalorder %s557, 1
      %s559 = scalar_select %p558, %s557, 1
      %s560 = smul.addr %s559, 8
      %s561 = scalar_lea.vmem %s1, %s560
      %p562 = pneg %p85
      %p563 = pneg %p82
      %s564 = smul.u32 2, %s28
      %p565 = scmp.lt.s32.totalorder %s564, 1
      %s566 = scalar_select %p565, %s564, 1
      %s567 = smul.addr %s566, 8
      %s568 = scalar_lea.vmem %s2, %s567
      %p569 = pneg %p111
      %p570 = pneg %p108
      %s571 = smul.u32 2, %s28
      %p572 = scmp.lt.s32.totalorder %s571, 1
      %s573 = scalar_select %p572, %s571, 1
      %s574 = smul.addr %s573, 8
      %s575 = scalar_lea.vmem %s3, %s574
      %p576 = pneg %p137
      %p577 = pneg %p134
      %s578 = smul.u32 2, %s28
      %p579 = scmp.lt.s32.totalorder %s578, 1
      %s580 = scalar_select %p579, %s578, 1
      %s581 = smul.addr %s580, 8
      %s582 = scalar_lea.vmem %s4, %s581
      %p583 = pneg %p163
      %p584 = pneg %p160
      %s585 = smul.u32 2, %s28
      %p586 = scmp.lt.s32.totalorder %s585, 1
      %s587 = scalar_select %p586, %s585, 1
      %s588 = smul.addr %s587, 8
      %s589 = scalar_lea.vmem %s5, %s588
      %p590 = pneg %p189
      %p591 = pneg %p186
      %s592 = smul.u32 2, %s28
      %p593 = scmp.lt.s32.totalorder %s592, 1
      %s594 = scalar_select %p593, %s592, 1
      %s595 = smul.addr %s594, 8
      %s596 = scalar_lea.vmem %s6, %s595
      %p597 = pneg %p215
      %p598 = pneg %p212
      %s599 = smul.u32 2, %s28
      %p600 = scmp.lt.s32.totalorder %s599, 1
      %s601 = scalar_select %p600, %s599, 1
      %s602 = smul.addr %s601, 8
      %s603 = scalar_lea.vmem %s7, %s602
      %p604 = pneg %p241
      %p605 = pneg %p238
      %s606 = smul.u32 2, %s28
      %p607 = scmp.lt.s32.totalorder %s606, 1
      %s608 = scalar_select %p607, %s606, 1
      %s609 = smul.addr %s608, 8
      %s610 = scalar_lea.vmem %s8, %s609
      %p611 = pneg %p267
      %p612 = pneg %p264
      %s613 = smul.u32 2, %s28
      %p614 = scmp.lt.s32.totalorder %s613, 1
      %s615 = scalar_select %p614, %s613, 1
      %s616 = smul.addr %s615, 8
      %s617 = scalar_lea.vmem %s9, %s616
      %p618 = pneg %p293
      %p619 = pneg %p290
      %s620 = smul.u32 2, %s28
      %p621 = scmp.lt.s32.totalorder %s620, 1
      %s622 = scalar_select %p621, %s620, 1
      %s623 = smul.addr %s622, 8
      %s624 = scalar_lea.vmem %s10, %s623
      %p625 = pneg %p319
      %p626 = pneg %p316
      %s627 = smul.u32 2, %s28
      %p628 = scmp.lt.s32.totalorder %s627, 1
      %s629 = scalar_select %p628, %s627, 1
      %s630 = smul.addr %s629, 8
      %s631 = scalar_lea.vmem %s11, %s630
      %p632 = pneg %p345
      %p633 = pneg %p342
      %s634 = smul.u32 2, %s28
      %p635 = scmp.lt.s32.totalorder %s634, 1
      %s636 = scalar_select %p635, %s634, 1
      %s637 = smul.addr %s636, 8
      %s638 = scalar_lea.vmem %s12, %s637
      %p639 = pneg %p371
      %p640 = pneg %p368
      %p641 = pneg %p399
      %p642 = pneg %p396
      %s643 = smul.u32 2, %s28
      %p644 = scmp.lt.s32.totalorder %s29, 1
      %s645 = scalar_select %p644, %s29, 1
      %p646 = scmp.lt.s32.totalorder %s643, 1
      %s647 = scalar_select %p646, %s643, 1
      %s648 = smul.addr %s645, 2
      %s649 = sadd.s32 %s647, %s648
      %s650 = smul.addr %s649, 8
      %s651 = scalar_lea.vmem %s13, %s650
      %s652 = smul.u32 2, %s28
      %p653 = scmp.lt.s32.totalorder %s29, 1
      %s654 = scalar_select %p653, %s29, 1
      %p655 = scmp.lt.s32.totalorder %s652, 1
      %s656 = scalar_select %p655, %s652, 1
      %s657 = smul.addr %s654, 2
      %s658 = sadd.s32 %s656, %s657
      %s659 = smul.addr %s658, 8
      %s660 = scalar_lea.vmem %s0, %s659
      %s661 = smul.u32 2, %s28
      %s662 = smul.u32 2, %s28
      %p663 = scmp.lt.s32.totalorder %s662, 1
      %s664 = scalar_select %p663, %s662, 1
      %s665 = smul.addr %s664, 8
      %s666 = scalar_lea.vmem %s1, %s665
      %s667 = smul.u32 2, %s28
      %s668 = smul.u32 2, %s28
      %p669 = scmp.lt.s32.totalorder %s668, 1
      %s670 = scalar_select %p669, %s668, 1
      %s671 = smul.addr %s670, 8
      %s672 = scalar_lea.vmem %s2, %s671
      %s673 = smul.u32 2, %s28
      %s674 = smul.u32 2, %s28
      %p675 = scmp.lt.s32.totalorder %s674, 1
      %s676 = scalar_select %p675, %s674, 1
      %s677 = smul.addr %s676, 8
      %s678 = scalar_lea.vmem %s3, %s677
      %s679 = smul.u32 2, %s28
      %s680 = smul.u32 2, %s28
      %p681 = scmp.lt.s32.totalorder %s680, 1
      %s682 = scalar_select %p681, %s680, 1
      %s683 = smul.addr %s682, 8
      %s684 = scalar_lea.vmem %s4, %s683
      %s685 = smul.u32 2, %s28
      %s686 = smul.u32 2, %s28
      %p687 = scmp.lt.s32.totalorder %s686, 1
      %s688 = scalar_select %p687, %s686, 1
      %s689 = smul.addr %s688, 8
      %s690 = scalar_lea.vmem %s5, %s689
      %s691 = smul.u32 2, %s28
      %s692 = smul.u32 2, %s28
      %p693 = scmp.lt.s32.totalorder %s692, 1
      %s694 = scalar_select %p693, %s692, 1
      %s695 = smul.addr %s694, 8
      %s696 = scalar_lea.vmem %s6, %s695
      %s697 = smul.u32 2, %s28
      %s698 = smul.u32 2, %s28
      %p699 = scmp.lt.s32.totalorder %s698, 1
      %s700 = scalar_select %p699, %s698, 1
      %s701 = smul.addr %s700, 8
      %s702 = scalar_lea.vmem %s7, %s701
      %s703 = smul.u32 2, %s28
      %s704 = smul.u32 2, %s28
      %p705 = scmp.lt.s32.totalorder %s704, 1
      %s706 = scalar_select %p705, %s704, 1
      %s707 = smul.addr %s706, 8
      %s708 = scalar_lea.vmem %s8, %s707
      %s709 = smul.u32 2, %s28
      %s710 = smul.u32 2, %s28
      %p711 = scmp.lt.s32.totalorder %s710, 1
      %s712 = scalar_select %p711, %s710, 1
      %s713 = smul.addr %s712, 8
      %s714 = scalar_lea.vmem %s9, %s713
      %s715 = smul.u32 2, %s28
      %s716 = smul.u32 2, %s28
      %p717 = scmp.lt.s32.totalorder %s716, 1
      %s718 = scalar_select %p717, %s716, 1
      %s719 = smul.addr %s718, 8
      %s720 = scalar_lea.vmem %s10, %s719
      %s721 = smul.u32 2, %s28
      %s722 = smul.u32 2, %s28
      %p723 = scmp.lt.s32.totalorder %s722, 1
      %s724 = scalar_select %p723, %s722, 1
      %s725 = smul.addr %s724, 8
      %s726 = scalar_lea.vmem %s11, %s725
      %s727 = smul.u32 2, %s28
      %s728 = smul.u32 2, %s28
      %p729 = scmp.lt.s32.totalorder %s728, 1
      %s730 = scalar_select %p729, %s728, 1
      %s731 = smul.addr %s730, 8
      %s732 = scalar_lea.vmem %s12, %s731
      %s733 = smul.u32 2, %s28
      %s734 = smul.u32 2, %s28
      %p735 = scmp.lt.s32.totalorder %s29, 1
      %s736 = scalar_select %p735, %s29, 1
      %p737 = scmp.lt.s32.totalorder %s734, 1
      %s738 = scalar_select %p737, %s734, 1
      %s739 = smul.addr %s736, 2
      %s740 = sadd.s32 %s738, %s739
      %s741 = smul.addr %s740, 8
      %s742 = scalar_lea.vmem %s13, %s741
      %s743 = smul.u32 2, %s28
      %v744 = vld [vmem:[%s660] sm:$0xff]
      %v745 = vld [vmem:[%s660 + $0x8] sm:$0xff]
      %v746 = vlaneseq
      %v747 = vand.u32 %v746, 127
      %v748 = vld [vmem:[%s672] sm:$0xff]
      %v749 = vld [vmem:[%s672 + $0x8] sm:$0xff]
      %v750 = vld [vmem:[%s666] sm:$0xff]
      %v751 = vld [vmem:[%s666 + $0x8] sm:$0xff]
      %753 = vset.pattern.permute.xlu0 0
      %754 = vperm.xlu0 %753, %v750
      %v755 = vpop.permute.xlu0 %754
      %758 = vset.pattern.permute.xlu0 0
      %759 = vperm.xlu0 %758, %v751
      %v760 = vpop.permute.xlu0 %759
      %v762 = vmul.f32 %v744, %v755
      %v763 = vmul.f32 %v745, %v760
      %765 = vset.pattern.permute.xlu0 0
      %766 = vperm.xlu0 %765, %v748
      %v767 = vpop.permute.xlu0 %766
      %770 = vset.pattern.permute.xlu0 0
      %771 = vperm.xlu0 %770, %v749
      %v772 = vpop.permute.xlu0 %771
      %v774 = vadd.f32 %v767, %v762
      %v775 = vadd.f32 %v772, %v763
      %776 = vrot.lane.b32.xlu0 %v744, 127
      %v777 = vpop.permute.xlu0 %776
      %778 = vrot.lane.b32.xlu0 %v745, 127
      %v779 = vpop.permute.xlu0 %778
      %s780 = scalar_lea.vmem %s666, 16
      %v781 = vld [vmem:[%s780] sm:$0xff]
      %v782 = vld [vmem:[%s780 + $0x8] sm:$0xff]
      %784 = vset.pattern.permute.xlu0 0
      %785 = vperm.xlu0 %784, %v781
      %v786 = vpop.permute.xlu0 %785
      %789 = vset.pattern.permute.xlu0 0
      %790 = vperm.xlu0 %789, %v782
      %v791 = vpop.permute.xlu0 %790
      %v793 = vmul.f32 %v777, %v786
      %v794 = vmul.f32 %v779, %v791
      %v795 = vadd.f32 %v774, %v793
      %v796 = vadd.f32 %v775, %v794
      %797 = vrot.lane.b32.xlu0 %v744, 126
      %v798 = vpop.permute.xlu0 %797
      %799 = vrot.lane.b32.xlu0 %v745, 126
      %v800 = vpop.permute.xlu0 %799
      %s801 = scalar_lea.vmem %s666, 32
      %v802 = vld [vmem:[%s801] sm:$0xff]
      %v803 = vld [vmem:[%s801 + $0x8] sm:$0xff]
      %805 = vset.pattern.permute.xlu0 0
      %806 = vperm.xlu0 %805, %v802
      %v807 = vpop.permute.xlu0 %806
      %810 = vset.pattern.permute.xlu0 0
      %811 = vperm.xlu0 %810, %v803
      %v812 = vpop.permute.xlu0 %811
      %v814 = vmul.f32 %v798, %v807
      %v815 = vmul.f32 %v800, %v812
      %v816 = vadd.f32 %v795, %v814
      %v817 = vadd.f32 %v796, %v815
      %v818 = vmax.f32 %v816, 0.0
      %v819 = vmax.f32 %v817, 0.0
      %v820 = vld [vmem:[%s684] sm:$0xff]
      %v821 = vld [vmem:[%s684 + $0x8] sm:$0xff]
      %v822 = vld [vmem:[%s678] sm:$0xff]
      %v823 = vld [vmem:[%s678 + $0x8] sm:$0xff]
      %825 = vset.pattern.permute.xlu0 0
      %826 = vperm.xlu0 %825, %v822
      %v827 = vpop.permute.xlu0 %826
      %830 = vset.pattern.permute.xlu0 0
      %831 = vperm.xlu0 %830, %v823
      %v832 = vpop.permute.xlu0 %831
      %v834 = vmul.f32 %v818, %v827
      %v835 = vmul.f32 %v819, %v832
      %837 = vset.pattern.permute.xlu0 0
      %838 = vperm.xlu0 %837, %v820
      %v839 = vpop.permute.xlu0 %838
      %842 = vset.pattern.permute.xlu0 0
      %843 = vperm.xlu0 %842, %v821
      %v844 = vpop.permute.xlu0 %843
      %v846 = vadd.f32 %v839, %v834
      %v847 = vadd.f32 %v844, %v835
      %848 = vrot.lane.b32.xlu0 %v818, 127
      %v849 = vpop.permute.xlu0 %848
      %850 = vrot.lane.b32.xlu0 %v819, 127
      %v851 = vpop.permute.xlu0 %850
      %s852 = scalar_lea.vmem %s678, 16
      %v853 = vld [vmem:[%s852] sm:$0xff]
      %v854 = vld [vmem:[%s852 + $0x8] sm:$0xff]
      %856 = vset.pattern.permute.xlu0 0
      %857 = vperm.xlu0 %856, %v853
      %v858 = vpop.permute.xlu0 %857
      %861 = vset.pattern.permute.xlu0 0
      %862 = vperm.xlu0 %861, %v854
      %v863 = vpop.permute.xlu0 %862
      %v865 = vmul.f32 %v849, %v858
      %v866 = vmul.f32 %v851, %v863
      %v867 = vadd.f32 %v846, %v865
      %v868 = vadd.f32 %v847, %v866
      %869 = vrot.lane.b32.xlu0 %v818, 126
      %v870 = vpop.permute.xlu0 %869
      %871 = vrot.lane.b32.xlu0 %v819, 126
      %v872 = vpop.permute.xlu0 %871
      %s873 = scalar_lea.vmem %s678, 32
      %v874 = vld [vmem:[%s873] sm:$0xff]
      %v875 = vld [vmem:[%s873 + $0x8] sm:$0xff]
      %877 = vset.pattern.permute.xlu0 0
      %878 = vperm.xlu0 %877, %v874
      %v879 = vpop.permute.xlu0 %878
      %882 = vset.pattern.permute.xlu0 0
      %883 = vperm.xlu0 %882, %v875
      %v884 = vpop.permute.xlu0 %883
      %v886 = vmul.f32 %v870, %v879
      %v887 = vmul.f32 %v872, %v884
      %v888 = vadd.f32 %v867, %v886
      %v889 = vadd.f32 %v868, %v887
      %v890 = vmax.f32 %v888, 0.0
      %v891 = vmax.f32 %v889, 0.0
      %vm892 = vcmp.lt.s32.totalorder %v747, 124
      %v893 = vsel %vm892, %v890, 0.0
      %v894 = vsel %vm892, %v891, 0.0
      %895 = vadd.xlane.f32.xlu0 %v893
      %v896 = vpop.xlane.xlu0 %895
      %897 = vadd.xlane.f32.xlu0 %v894
      %v898 = vpop.xlane.xlu0 %897
      %v899 = vmul.f32 %v896, 0.008064516
      %v900 = vmul.f32 %v898, 0.008064516
      %v901 = vld [vmem:[%s696] sm:$0xff]
      %v902 = vld [vmem:[%s696 + $0x8] sm:$0xff]
      %v903 = vld [vmem:[%s690] sm:$0xff]
      %v904 = vld [vmem:[%s690 + $0x8] sm:$0xff]
      %906 = vset.pattern.permute.xlu0 0
      %907 = vperm.xlu0 %906, %v903
      %v908 = vpop.permute.xlu0 %907
      %911 = vset.pattern.permute.xlu0 0
      %912 = vperm.xlu0 %911, %v904
      %v913 = vpop.permute.xlu0 %912
      %v915 = vmul.f32 %v744, %v908
      %v916 = vmul.f32 %v745, %v913
      %918 = vset.pattern.permute.xlu0 0
      %919 = vperm.xlu0 %918, %v901
      %v920 = vpop.permute.xlu0 %919
      %923 = vset.pattern.permute.xlu0 0
      %924 = vperm.xlu0 %923, %v902
      %v925 = vpop.permute.xlu0 %924
      %v927 = vadd.f32 %v920, %v915
      %v928 = vadd.f32 %v925, %v916
      %s929 = scalar_lea.vmem %s690, 16
      %v930 = vld [vmem:[%s929] sm:$0xff]
      %v931 = vld [vmem:[%s929 + $0x8] sm:$0xff]
      %933 = vset.pattern.permute.xlu0 0
      %934 = vperm.xlu0 %933, %v930
      %v935 = vpop.permute.xlu0 %934
      %938 = vset.pattern.permute.xlu0 0
      %939 = vperm.xlu0 %938, %v931
      %v940 = vpop.permute.xlu0 %939
      %v942 = vmul.f32 %v777, %v935
      %v943 = vmul.f32 %v779, %v940
      %v944 = vadd.f32 %v927, %v942
      %v945 = vadd.f32 %v928, %v943
      %s946 = scalar_lea.vmem %s690, 32
      %v947 = vld [vmem:[%s946] sm:$0xff]
      %v948 = vld [vmem:[%s946 + $0x8] sm:$0xff]
      %950 = vset.pattern.permute.xlu0 0
      %951 = vperm.xlu0 %950, %v947
      %v952 = vpop.permute.xlu0 %951
      %955 = vset.pattern.permute.xlu0 0
      %956 = vperm.xlu0 %955, %v948
      %v957 = vpop.permute.xlu0 %956
      %v959 = vmul.f32 %v798, %v952
      %v960 = vmul.f32 %v800, %v957
      %v961 = vadd.f32 %v944, %v959
      %v962 = vadd.f32 %v945, %v960
      %963 = vrot.lane.b32.xlu0 %v744, 125
      %v964 = vpop.permute.xlu0 %963
      %965 = vrot.lane.b32.xlu0 %v745, 125
      %v966 = vpop.permute.xlu0 %965
      %s967 = scalar_lea.vmem %s690, 48
      %v968 = vld [vmem:[%s967] sm:$0xff]
      %v969 = vld [vmem:[%s967 + $0x8] sm:$0xff]
      %971 = vset.pattern.permute.xlu0 0
      %972 = vperm.xlu0 %971, %v968
      %v973 = vpop.permute.xlu0 %972
      %976 = vset.pattern.permute.xlu0 0
      %977 = vperm.xlu0 %976, %v969
      %v978 = vpop.permute.xlu0 %977
      %v980 = vmul.f32 %v964, %v973
      %v981 = vmul.f32 %v966, %v978
      %v982 = vadd.f32 %v961, %v980
      %v983 = vadd.f32 %v962, %v981
      %984 = vrot.lane.b32.xlu0 %v744, 124
      %v985 = vpop.permute.xlu0 %984
      %986 = vrot.lane.b32.xlu0 %v745, 124
      %v987 = vpop.permute.xlu0 %986
      %s988 = scalar_lea.vmem %s690, 64
      %v989 = vld [vmem:[%s988] sm:$0xff]
      %v990 = vld [vmem:[%s988 + $0x8] sm:$0xff]
      %992 = vset.pattern.permute.xlu0 0
      %993 = vperm.xlu0 %992, %v989
      %v994 = vpop.permute.xlu0 %993
      %997 = vset.pattern.permute.xlu0 0
      %998 = vperm.xlu0 %997, %v990
      %v999 = vpop.permute.xlu0 %998
      %v1001 = vmul.f32 %v985, %v994
      %v1002 = vmul.f32 %v987, %v999
      %v1003 = vadd.f32 %v982, %v1001
      %v1004 = vadd.f32 %v983, %v1002
      %v1005 = vmax.f32 %v1003, 0.0
      %v1006 = vmax.f32 %v1004, 0.0
      %v1007 = vld [vmem:[%s708] sm:$0xff]
      %v1008 = vld [vmem:[%s708 + $0x8] sm:$0xff]
      %v1009 = vld [vmem:[%s702] sm:$0xff]
      %v1010 = vld [vmem:[%s702 + $0x8] sm:$0xff]
      %1012 = vset.pattern.permute.xlu0 0
      %1013 = vperm.xlu0 %1012, %v1009
      %v1014 = vpop.permute.xlu0 %1013
      %1017 = vset.pattern.permute.xlu0 0
      %1018 = vperm.xlu0 %1017, %v1010
      %v1019 = vpop.permute.xlu0 %1018
      %v1021 = vmul.f32 %v1005, %v1014
      %v1022 = vmul.f32 %v1006, %v1019
      %1024 = vset.pattern.permute.xlu0 0
      %1025 = vperm.xlu0 %1024, %v1007
      %v1026 = vpop.permute.xlu0 %1025
      %1029 = vset.pattern.permute.xlu0 0
      %1030 = vperm.xlu0 %1029, %v1008
      %v1031 = vpop.permute.xlu0 %1030
      %v1033 = vadd.f32 %v1026, %v1021
      %v1034 = vadd.f32 %v1031, %v1022
      %1035 = vrot.lane.b32.xlu0 %v1005, 127
      %v1036 = vpop.permute.xlu0 %1035
      %1037 = vrot.lane.b32.xlu0 %v1006, 127
      %v1038 = vpop.permute.xlu0 %1037
      %s1039 = scalar_lea.vmem %s702, 16
      %v1040 = vld [vmem:[%s1039] sm:$0xff]
      %v1041 = vld [vmem:[%s1039 + $0x8] sm:$0xff]
      %1043 = vset.pattern.permute.xlu0 0
      %1044 = vperm.xlu0 %1043, %v1040
      %v1045 = vpop.permute.xlu0 %1044
      %1048 = vset.pattern.permute.xlu0 0
      %1049 = vperm.xlu0 %1048, %v1041
      %v1050 = vpop.permute.xlu0 %1049
      %v1052 = vmul.f32 %v1036, %v1045
      %v1053 = vmul.f32 %v1038, %v1050
      %v1054 = vadd.f32 %v1033, %v1052
      %v1055 = vadd.f32 %v1034, %v1053
      %1056 = vrot.lane.b32.xlu0 %v1005, 126
      %v1057 = vpop.permute.xlu0 %1056
      %1058 = vrot.lane.b32.xlu0 %v1006, 126
      %v1059 = vpop.permute.xlu0 %1058
      %s1060 = scalar_lea.vmem %s702, 32
      %v1061 = vld [vmem:[%s1060] sm:$0xff]
      %v1062 = vld [vmem:[%s1060 + $0x8] sm:$0xff]
      %1064 = vset.pattern.permute.xlu0 0
      %1065 = vperm.xlu0 %1064, %v1061
      %v1066 = vpop.permute.xlu0 %1065
      %1069 = vset.pattern.permute.xlu0 0
      %1070 = vperm.xlu0 %1069, %v1062
      %v1071 = vpop.permute.xlu0 %1070
      %v1073 = vmul.f32 %v1057, %v1066
      %v1074 = vmul.f32 %v1059, %v1071
      %v1075 = vadd.f32 %v1054, %v1073
      %v1076 = vadd.f32 %v1055, %v1074
      %1077 = vrot.lane.b32.xlu0 %v1005, 125
      %v1078 = vpop.permute.xlu0 %1077
      %1079 = vrot.lane.b32.xlu0 %v1006, 125
      %v1080 = vpop.permute.xlu0 %1079
      %s1081 = scalar_lea.vmem %s702, 48
      %v1082 = vld [vmem:[%s1081] sm:$0xff]
      %v1083 = vld [vmem:[%s1081 + $0x8] sm:$0xff]
      %1085 = vset.pattern.permute.xlu0 0
      %1086 = vperm.xlu0 %1085, %v1082
      %v1087 = vpop.permute.xlu0 %1086
      %1090 = vset.pattern.permute.xlu0 0
      %1091 = vperm.xlu0 %1090, %v1083
      %v1092 = vpop.permute.xlu0 %1091
      %v1094 = vmul.f32 %v1078, %v1087
      %v1095 = vmul.f32 %v1080, %v1092
      %v1096 = vadd.f32 %v1075, %v1094
      %v1097 = vadd.f32 %v1076, %v1095
      %1098 = vrot.lane.b32.xlu0 %v1005, 124
      %v1099 = vpop.permute.xlu0 %1098
      %1100 = vrot.lane.b32.xlu0 %v1006, 124
      %v1101 = vpop.permute.xlu0 %1100
      %s1102 = scalar_lea.vmem %s702, 64
      %v1103 = vld [vmem:[%s1102] sm:$0xff]
      %v1104 = vld [vmem:[%s1102 + $0x8] sm:$0xff]
      %1106 = vset.pattern.permute.xlu0 0
      %1107 = vperm.xlu0 %1106, %v1103
      %v1108 = vpop.permute.xlu0 %1107
      %1111 = vset.pattern.permute.xlu0 0
      %1112 = vperm.xlu0 %1111, %v1104
      %v1113 = vpop.permute.xlu0 %1112
      %v1115 = vmul.f32 %v1099, %v1108
      %v1116 = vmul.f32 %v1101, %v1113
      %v1117 = vadd.f32 %v1096, %v1115
      %v1118 = vadd.f32 %v1097, %v1116
      %v1119 = vmax.f32 %v1117, 0.0
      %v1120 = vmax.f32 %v1118, 0.0
      %vm1121 = vcmp.lt.s32.totalorder %v747, 120
      %v1122 = vsel %vm1121, %v1119, 0.0
      %v1123 = vsel %vm1121, %v1120, 0.0
      %1124 = vadd.xlane.f32.xlu0 %v1122
      %v1125 = vpop.xlane.xlu0 %1124
      %1126 = vadd.xlane.f32.xlu0 %v1123
      %v1127 = vpop.xlane.xlu0 %1126
      %v1128 = vmul.f32 %v1125, 0.008333334
      %v1129 = vmul.f32 %v1127, 0.008333334
      %v1130 = vld [vmem:[%s720] sm:$0xff]
      %v1131 = vld [vmem:[%s720 + $0x8] sm:$0xff]
      %v1132 = vld [vmem:[%s714] sm:$0xff]
      %v1133 = vld [vmem:[%s714 + $0x8] sm:$0xff]
      %1135 = vset.pattern.permute.xlu0 0
      %1136 = vperm.xlu0 %1135, %v1132
      %v1137 = vpop.permute.xlu0 %1136
      %1140 = vset.pattern.permute.xlu0 0
      %1141 = vperm.xlu0 %1140, %v1133
      %v1142 = vpop.permute.xlu0 %1141
      %v1144 = vmul.f32 %v744, %v1137
      %v1145 = vmul.f32 %v745, %v1142
      %1147 = vset.pattern.permute.xlu0 0
      %1148 = vperm.xlu0 %1147, %v1130
      %v1149 = vpop.permute.xlu0 %1148
      %1152 = vset.pattern.permute.xlu0 0
      %1153 = vperm.xlu0 %1152, %v1131
      %v1154 = vpop.permute.xlu0 %1153
      %v1156 = vadd.f32 %v1149, %v1144
      %v1157 = vadd.f32 %v1154, %v1145
      %s1158 = scalar_lea.vmem %s714, 16
      %v1159 = vld [vmem:[%s1158] sm:$0xff]
      %v1160 = vld [vmem:[%s1158 + $0x8] sm:$0xff]
      %1162 = vset.pattern.permute.xlu0 0
      %1163 = vperm.xlu0 %1162, %v1159
      %v1164 = vpop.permute.xlu0 %1163
      %1167 = vset.pattern.permute.xlu0 0
      %1168 = vperm.xlu0 %1167, %v1160
      %v1169 = vpop.permute.xlu0 %1168
      %v1171 = vmul.f32 %v777, %v1164
      %v1172 = vmul.f32 %v779, %v1169
      %v1173 = vadd.f32 %v1156, %v1171
      %v1174 = vadd.f32 %v1157, %v1172
      %s1175 = scalar_lea.vmem %s714, 32
      %v1176 = vld [vmem:[%s1175] sm:$0xff]
      %v1177 = vld [vmem:[%s1175 + $0x8] sm:$0xff]
      %1179 = vset.pattern.permute.xlu0 0
      %1180 = vperm.xlu0 %1179, %v1176
      %v1181 = vpop.permute.xlu0 %1180
      %1184 = vset.pattern.permute.xlu0 0
      %1185 = vperm.xlu0 %1184, %v1177
      %v1186 = vpop.permute.xlu0 %1185
      %v1188 = vmul.f32 %v798, %v1181
      %v1189 = vmul.f32 %v800, %v1186
      %v1190 = vadd.f32 %v1173, %v1188
      %v1191 = vadd.f32 %v1174, %v1189
      %s1192 = scalar_lea.vmem %s714, 48
      %v1193 = vld [vmem:[%s1192] sm:$0xff]
      %v1194 = vld [vmem:[%s1192 + $0x8] sm:$0xff]
      %1196 = vset.pattern.permute.xlu0 0
      %1197 = vperm.xlu0 %1196, %v1193
      %v1198 = vpop.permute.xlu0 %1197
      %1201 = vset.pattern.permute.xlu0 0
      %1202 = vperm.xlu0 %1201, %v1194
      %v1203 = vpop.permute.xlu0 %1202
      %v1205 = vmul.f32 %v964, %v1198
      %v1206 = vmul.f32 %v966, %v1203
      %v1207 = vadd.f32 %v1190, %v1205
      %v1208 = vadd.f32 %v1191, %v1206
      %s1209 = scalar_lea.vmem %s714, 64
      %v1210 = vld [vmem:[%s1209] sm:$0xff]
      %v1211 = vld [vmem:[%s1209 + $0x8] sm:$0xff]
      %1213 = vset.pattern.permute.xlu0 0
      %1214 = vperm.xlu0 %1213, %v1210
      %v1215 = vpop.permute.xlu0 %1214
      %1218 = vset.pattern.permute.xlu0 0
      %1219 = vperm.xlu0 %1218, %v1211
      %v1220 = vpop.permute.xlu0 %1219
      %v1222 = vmul.f32 %v985, %v1215
      %v1223 = vmul.f32 %v987, %v1220
      %v1224 = vadd.f32 %v1207, %v1222
      %v1225 = vadd.f32 %v1208, %v1223
      %1226 = vrot.lane.b32.xlu0 %v744, 123
      %v1227 = vpop.permute.xlu0 %1226
      %1228 = vrot.lane.b32.xlu0 %v745, 123
      %v1229 = vpop.permute.xlu0 %1228
      %s1230 = scalar_lea.vmem %s714, 80
      %v1231 = vld [vmem:[%s1230] sm:$0xff]
      %v1232 = vld [vmem:[%s1230 + $0x8] sm:$0xff]
      %1234 = vset.pattern.permute.xlu0 0
      %1235 = vperm.xlu0 %1234, %v1231
      %v1236 = vpop.permute.xlu0 %1235
      %1239 = vset.pattern.permute.xlu0 0
      %1240 = vperm.xlu0 %1239, %v1232
      %v1241 = vpop.permute.xlu0 %1240
      %v1243 = vmul.f32 %v1227, %v1236
      %v1244 = vmul.f32 %v1229, %v1241
      %v1245 = vadd.f32 %v1224, %v1243
      %v1246 = vadd.f32 %v1225, %v1244
      %1247 = vrot.lane.b32.xlu0 %v744, 122
      %v1248 = vpop.permute.xlu0 %1247
      %1249 = vrot.lane.b32.xlu0 %v745, 122
      %v1250 = vpop.permute.xlu0 %1249
      %s1251 = scalar_lea.vmem %s714, 96
      %v1252 = vld [vmem:[%s1251] sm:$0xff]
      %v1253 = vld [vmem:[%s1251 + $0x8] sm:$0xff]
      %1255 = vset.pattern.permute.xlu0 0
      %1256 = vperm.xlu0 %1255, %v1252
      %v1257 = vpop.permute.xlu0 %1256
      %1260 = vset.pattern.permute.xlu0 0
      %1261 = vperm.xlu0 %1260, %v1253
      %v1262 = vpop.permute.xlu0 %1261
      %v1264 = vmul.f32 %v1248, %v1257
      %v1265 = vmul.f32 %v1250, %v1262
      %v1266 = vadd.f32 %v1245, %v1264
      %v1267 = vadd.f32 %v1246, %v1265
      %1268 = vrot.lane.b32.xlu0 %v744, 121
      %v1269 = vpop.permute.xlu0 %1268
      %1270 = vrot.lane.b32.xlu0 %v745, 121
      %v1271 = vpop.permute.xlu0 %1270
      %s1272 = scalar_lea.vmem %s714, 112
      %v1273 = vld [vmem:[%s1272] sm:$0xff]
      %v1274 = vld [vmem:[%s1272 + $0x8] sm:$0xff]
      %1276 = vset.pattern.permute.xlu0 0
      %1277 = vperm.xlu0 %1276, %v1273
      %v1278 = vpop.permute.xlu0 %1277
      %1281 = vset.pattern.permute.xlu0 0
      %1282 = vperm.xlu0 %1281, %v1274
      %v1283 = vpop.permute.xlu0 %1282
      %v1285 = vmul.f32 %v1269, %v1278
      %v1286 = vmul.f32 %v1271, %v1283
      %v1287 = vadd.f32 %v1266, %v1285
      %v1288 = vadd.f32 %v1267, %v1286
      %1289 = vrot.lane.b32.xlu0 %v744, 120
      %v1290 = vpop.permute.xlu0 %1289
      %1291 = vrot.lane.b32.xlu0 %v745, 120
      %v1292 = vpop.permute.xlu0 %1291
      %s1293 = scalar_lea.vmem %s714, 128
      %v1294 = vld [vmem:[%s1293] sm:$0xff]
      %v1295 = vld [vmem:[%s1293 + $0x8] sm:$0xff]
      %1297 = vset.pattern.permute.xlu0 0
      %1298 = vperm.xlu0 %1297, %v1294
      %v1299 = vpop.permute.xlu0 %1298
      %1302 = vset.pattern.permute.xlu0 0
      %1303 = vperm.xlu0 %1302, %v1295
      %v1304 = vpop.permute.xlu0 %1303
      %v1306 = vmul.f32 %v1290, %v1299
      %v1307 = vmul.f32 %v1292, %v1304
      %v1308 = vadd.f32 %v1287, %v1306
      %v1309 = vadd.f32 %v1288, %v1307
      %1310 = vrot.lane.b32.xlu0 %v744, 119
      %v1311 = vpop.permute.xlu0 %1310
      %1312 = vrot.lane.b32.xlu0 %v745, 119
      %v1313 = vpop.permute.xlu0 %1312
      %s1314 = scalar_lea.vmem %s714, 144
      %v1315 = vld [vmem:[%s1314] sm:$0xff]
      %v1316 = vld [vmem:[%s1314 + $0x8] sm:$0xff]
      %1318 = vset.pattern.permute.xlu0 0
      %1319 = vperm.xlu0 %1318, %v1315
      %v1320 = vpop.permute.xlu0 %1319
      %1323 = vset.pattern.permute.xlu0 0
      %1324 = vperm.xlu0 %1323, %v1316
      %v1325 = vpop.permute.xlu0 %1324
      %v1327 = vmul.f32 %v1311, %v1320
      %v1328 = vmul.f32 %v1313, %v1325
      %v1329 = vadd.f32 %v1308, %v1327
      %v1330 = vadd.f32 %v1309, %v1328
      %v1331 = vmax.f32 %v1329, 0.0
      %v1332 = vmax.f32 %v1330, 0.0
      %v1333 = vld [vmem:[%s732] sm:$0xff]
      %v1334 = vld [vmem:[%s732 + $0x8] sm:$0xff]
      %v1335 = vld [vmem:[%s726] sm:$0xff]
      %v1336 = vld [vmem:[%s726 + $0x8] sm:$0xff]
      %1338 = vset.pattern.permute.xlu0 0
      %1339 = vperm.xlu0 %1338, %v1335
      %v1340 = vpop.permute.xlu0 %1339
      %1343 = vset.pattern.permute.xlu0 0
      %1344 = vperm.xlu0 %1343, %v1336
      %v1345 = vpop.permute.xlu0 %1344
      %v1347 = vmul.f32 %v1331, %v1340
      %v1348 = vmul.f32 %v1332, %v1345
      %1350 = vset.pattern.permute.xlu0 0
      %1351 = vperm.xlu0 %1350, %v1333
      %v1352 = vpop.permute.xlu0 %1351
      %1355 = vset.pattern.permute.xlu0 0
      %1356 = vperm.xlu0 %1355, %v1334
      %v1357 = vpop.permute.xlu0 %1356
      %v1359 = vadd.f32 %v1352, %v1347
      %v1360 = vadd.f32 %v1357, %v1348
      %1361 = vrot.lane.b32.xlu0 %v1331, 127
      %v1362 = vpop.permute.xlu0 %1361
      %1363 = vrot.lane.b32.xlu0 %v1332, 127
      %v1364 = vpop.permute.xlu0 %1363
      %s1365 = scalar_lea.vmem %s726, 16
      %v1366 = vld [vmem:[%s1365] sm:$0xff]
      %v1367 = vld [vmem:[%s1365 + $0x8] sm:$0xff]
      %1369 = vset.pattern.permute.xlu0 0
      %1370 = vperm.xlu0 %1369, %v1366
      %v1371 = vpop.permute.xlu0 %1370
      %1374 = vset.pattern.permute.xlu0 0
      %1375 = vperm.xlu0 %1374, %v1367
      %v1376 = vpop.permute.xlu0 %1375
      %v1378 = vmul.f32 %v1362, %v1371
      %v1379 = vmul.f32 %v1364, %v1376
      %v1380 = vadd.f32 %v1359, %v1378
      %v1381 = vadd.f32 %v1360, %v1379
      %1382 = vrot.lane.b32.xlu0 %v1331, 126
      %v1383 = vpop.permute.xlu0 %1382
      %1384 = vrot.lane.b32.xlu0 %v1332, 126
      %v1385 = vpop.permute.xlu0 %1384
      %s1386 = scalar_lea.vmem %s726, 32
      %v1387 = vld [vmem:[%s1386] sm:$0xff]
      %v1388 = vld [vmem:[%s1386 + $0x8] sm:$0xff]
      %1390 = vset.pattern.permute.xlu0 0
      %1391 = vperm.xlu0 %1390, %v1387
      %v1392 = vpop.permute.xlu0 %1391
      %1395 = vset.pattern.permute.xlu0 0
      %1396 = vperm.xlu0 %1395, %v1388
      %v1397 = vpop.permute.xlu0 %1396
      %v1399 = vmul.f32 %v1383, %v1392
      %v1400 = vmul.f32 %v1385, %v1397
      %v1401 = vadd.f32 %v1380, %v1399
      %v1402 = vadd.f32 %v1381, %v1400
      %1403 = vrot.lane.b32.xlu0 %v1331, 125
      %v1404 = vpop.permute.xlu0 %1403
      %1405 = vrot.lane.b32.xlu0 %v1332, 125
      %v1406 = vpop.permute.xlu0 %1405
      %s1407 = scalar_lea.vmem %s726, 48
      %v1408 = vld [vmem:[%s1407] sm:$0xff]
      %v1409 = vld [vmem:[%s1407 + $0x8] sm:$0xff]
      %1411 = vset.pattern.permute.xlu0 0
      %1412 = vperm.xlu0 %1411, %v1408
      %v1413 = vpop.permute.xlu0 %1412
      %1416 = vset.pattern.permute.xlu0 0
      %1417 = vperm.xlu0 %1416, %v1409
      %v1418 = vpop.permute.xlu0 %1417
      %v1420 = vmul.f32 %v1404, %v1413
      %v1421 = vmul.f32 %v1406, %v1418
      %v1422 = vadd.f32 %v1401, %v1420
      %v1423 = vadd.f32 %v1402, %v1421
      %1424 = vrot.lane.b32.xlu0 %v1331, 124
      %v1425 = vpop.permute.xlu0 %1424
      %1426 = vrot.lane.b32.xlu0 %v1332, 124
      %v1427 = vpop.permute.xlu0 %1426
      %s1428 = scalar_lea.vmem %s726, 64
      %v1429 = vld [vmem:[%s1428] sm:$0xff]
      %v1430 = vld [vmem:[%s1428 + $0x8] sm:$0xff]
      %1432 = vset.pattern.permute.xlu0 0
      %1433 = vperm.xlu0 %1432, %v1429
      %v1434 = vpop.permute.xlu0 %1433
      %1437 = vset.pattern.permute.xlu0 0
      %1438 = vperm.xlu0 %1437, %v1430
      %v1439 = vpop.permute.xlu0 %1438
      %v1441 = vmul.f32 %v1425, %v1434
      %v1442 = vmul.f32 %v1427, %v1439
      %v1443 = vadd.f32 %v1422, %v1441
      %v1444 = vadd.f32 %v1423, %v1442
      %1445 = vrot.lane.b32.xlu0 %v1331, 123
      %v1446 = vpop.permute.xlu0 %1445
      %1447 = vrot.lane.b32.xlu0 %v1332, 123
      %v1448 = vpop.permute.xlu0 %1447
      %s1449 = scalar_lea.vmem %s726, 80
      %v1450 = vld [vmem:[%s1449] sm:$0xff]
      %v1451 = vld [vmem:[%s1449 + $0x8] sm:$0xff]
      %1453 = vset.pattern.permute.xlu0 0
      %1454 = vperm.xlu0 %1453, %v1450
      %v1455 = vpop.permute.xlu0 %1454
      %1458 = vset.pattern.permute.xlu0 0
      %1459 = vperm.xlu0 %1458, %v1451
      %v1460 = vpop.permute.xlu0 %1459
      %v1462 = vmul.f32 %v1446, %v1455
      %v1463 = vmul.f32 %v1448, %v1460
      %v1464 = vadd.f32 %v1443, %v1462
      %v1465 = vadd.f32 %v1444, %v1463
      %1466 = vrot.lane.b32.xlu0 %v1331, 122
      %v1467 = vpop.permute.xlu0 %1466
      %1468 = vrot.lane.b32.xlu0 %v1332, 122
      %v1469 = vpop.permute.xlu0 %1468
      %s1470 = scalar_lea.vmem %s726, 96
      %v1471 = vld [vmem:[%s1470] sm:$0xff]
      %v1472 = vld [vmem:[%s1470 + $0x8] sm:$0xff]
      %1474 = vset.pattern.permute.xlu0 0
      %1475 = vperm.xlu0 %1474, %v1471
      %v1476 = vpop.permute.xlu0 %1475
      %1479 = vset.pattern.permute.xlu0 0
      %1480 = vperm.xlu0 %1479, %v1472
      %v1481 = vpop.permute.xlu0 %1480
      %v1483 = vmul.f32 %v1467, %v1476
      %v1484 = vmul.f32 %v1469, %v1481
      %v1485 = vadd.f32 %v1464, %v1483
      %v1486 = vadd.f32 %v1465, %v1484
      %1487 = vrot.lane.b32.xlu0 %v1331, 121
      %v1488 = vpop.permute.xlu0 %1487
      %1489 = vrot.lane.b32.xlu0 %v1332, 121
      %v1490 = vpop.permute.xlu0 %1489
      %s1491 = scalar_lea.vmem %s726, 112
      %v1492 = vld [vmem:[%s1491] sm:$0xff]
      %v1493 = vld [vmem:[%s1491 + $0x8] sm:$0xff]
      %1495 = vset.pattern.permute.xlu0 0
      %1496 = vperm.xlu0 %1495, %v1492
      %v1497 = vpop.permute.xlu0 %1496
      %1500 = vset.pattern.permute.xlu0 0
      %1501 = vperm.xlu0 %1500, %v1493
      %v1502 = vpop.permute.xlu0 %1501
      %v1504 = vmul.f32 %v1488, %v1497
      %v1505 = vmul.f32 %v1490, %v1502
      %v1506 = vadd.f32 %v1485, %v1504
      %v1507 = vadd.f32 %v1486, %v1505
      %1508 = vrot.lane.b32.xlu0 %v1331, 120
      %v1509 = vpop.permute.xlu0 %1508
      %1510 = vrot.lane.b32.xlu0 %v1332, 120
      %v1511 = vpop.permute.xlu0 %1510
      %s1512 = scalar_lea.vmem %s726, 128
      %v1513 = vld [vmem:[%s1512] sm:$0xff]
      %v1514 = vld [vmem:[%s1512 + $0x8] sm:$0xff]
      %1516 = vset.pattern.permute.xlu0 0
      %1517 = vperm.xlu0 %1516, %v1513
      %v1518 = vpop.permute.xlu0 %1517
      %1521 = vset.pattern.permute.xlu0 0
      %1522 = vperm.xlu0 %1521, %v1514
      %v1523 = vpop.permute.xlu0 %1522
      %v1525 = vmul.f32 %v1509, %v1518
      %v1526 = vmul.f32 %v1511, %v1523
      %v1527 = vadd.f32 %v1506, %v1525
      %v1528 = vadd.f32 %v1507, %v1526
      %1529 = vrot.lane.b32.xlu0 %v1331, 119
      %v1530 = vpop.permute.xlu0 %1529
      %1531 = vrot.lane.b32.xlu0 %v1332, 119
      %v1532 = vpop.permute.xlu0 %1531
      %s1533 = scalar_lea.vmem %s726, 144
      %v1534 = vld [vmem:[%s1533] sm:$0xff]
      %v1535 = vld [vmem:[%s1533 + $0x8] sm:$0xff]
      %1537 = vset.pattern.permute.xlu0 0
      %1538 = vperm.xlu0 %1537, %v1534
      %v1539 = vpop.permute.xlu0 %1538
      %1542 = vset.pattern.permute.xlu0 0
      %1543 = vperm.xlu0 %1542, %v1535
      %v1544 = vpop.permute.xlu0 %1543
      %v1546 = vmul.f32 %v1530, %v1539
      %v1547 = vmul.f32 %v1532, %v1544
      %v1548 = vadd.f32 %v1527, %v1546
      %v1549 = vadd.f32 %v1528, %v1547
      %v1550 = vmax.f32 %v1548, 0.0
      %v1551 = vmax.f32 %v1549, 0.0
      %vm1552 = vcmp.lt.s32.totalorder %v747, 110
      %v1553 = vsel %vm1552, %v1550, 0.0
      %v1554 = vsel %vm1552, %v1551, 0.0
      %1555 = vadd.xlane.f32.xlu0 %v1553
      %v1556 = vpop.xlane.xlu0 %1555
      %1557 = vadd.xlane.f32.xlu0 %v1554
      %v1558 = vpop.xlane.xlu0 %1557
      %v1559 = vmul.f32 %v1556, 0.009090909
      %v1560 = vmul.f32 %v1558, 0.009090909
      %vm1561 = vcmask 7168
      %v1562 = vsel %vm1561, %v899, %v1128
      %v1563 = vsel %vm1561, %v900, %v1129
      %vm1564 = vcmask 15360
      %v1565 = vsel %vm1564, %v1562, %v1559
      %v1566 = vsel %vm1564, %v1563, %v1560
      %vm1567 = vcmask 23552
      %1568 = vst.msk [vmem:[%s742] sm:$0xff] %vm1567, %v1565
      %1569 = vst.msk [vmem:[%s742 + $0x8] sm:$0xff] %vm1567, %v1566
      %s1570 = smul.u32 2, %s28
      %p1571 = scmp.lt.s32.totalorder %s29, 1
      %s1572 = scalar_select %p1571, %s29, 1
      %p1573 = scmp.lt.s32.totalorder %s1570, 1
      %s1574 = scalar_select %p1573, %s1570, 1
      %s1575 = smul.addr %s1572, 2
      %s1576 = sadd.s32 %s1574, %s1575
      %s1577 = smul.addr %s1576, 8
      %s1578 = scalar_lea.vmem %s13, %s1577
      // Predicated region
      $region73: #{tpu_custom_call.1} parent=71 // pred_check
        %p1579 = pneg %p396
      $region74: #{tpu_custom_call.1} parent=71 // pred_check_branch
        %1581 = sbr.rel (%p1579) target = $region76
      $region75: #{tpu_custom_call.1} parent=71 // pred_region
        %s1582 = smul.u32 2, %s28
      $region76: #{tpu_custom_call.1} parent=71 // pred_fallthru
        _
    $region72: #{tpu_custom_call.1} parent=5 // pred_fallthru
      _
    %p1583 = scmp.le.s32.totalorder 2, %s19
    // Predicated region
    $region77: #{tpu_custom_call.1} parent=5 // pred_check
      %p1584 = pneg %p1583
    $region78: #{tpu_custom_call.1} parent=5 // pred_check_branch
      %1586 = sbr.rel (%p1584) target = $region80
    $region79: #{tpu_custom_call.1} parent=5 // pred_region
      %s1587 = ssub.s32 %s19, 2
      // Predicated region
      $region81: #{tpu_custom_call.1} parent=79 // pred_check
        %p1588 = pneg %p402
      $region82: #{tpu_custom_call.1} parent=79 // pred_check_branch
        %1590 = sbr.rel (%p1588) target = $region84
      $region83: #{tpu_custom_call.1} parent=79 // pred_region
        %s1591 = smul.u32 2, %s30
        %p1592 = scmp.lt.s32.totalorder %s31, 1
        %s1593 = scalar_select %p1592, %s31, 1
        %p1594 = scmp.lt.s32.totalorder %s1591, 1
        %s1595 = scalar_select %p1594, %s1591, 1
        %s1596 = smul.addr %s1593, 2
        %s1597 = sadd.s32 %s1595, %s1596
        %s1598 = smul.addr %s1597, 8
        %s1599 = scalar_lea.vmem %s13, %s1598
      $region84: #{tpu_custom_call.1} parent=79 // pred_fallthru
        _
    $region80: #{tpu_custom_call.1} parent=5 // pred_fallthru
      _
  $region6: #{tpu_custom_call.1} parent=0 // loop_footer
    %s23 = sadd.s32 1, %s19
  $region7: #{tpu_custom_call.1} parent=0 // loop_footer_branch
    %18 = sbr.rel target = $region3
  $region8: #{tpu_custom_call.1} parent=0 // loop_exit
    _

</llo_original>
